<compile_context>
chip_gen: v6e
topology: v6e:2x2x1
jax: 0.10.0
libtpu: 0.0.40
codegen_flags: <defaults>
</compile_context>

<pallas_src>
import functools

import numpy as np
import jax
import jax.numpy as jnp
from jax import lax
from jax.experimental import pallas as pl
from jax.experimental.pallas import tpu as pltpu

EPS = 1e-5      # PyTorch BatchNorm2d default eps
LEAKY = 0.2     # LeakyReLU negative slope

# _KIDX[output_parity][dy] -> ConvTranspose2d(k=4,s=2,p=1) kernel tap index
_KIDX = ((3, 1), (2, 0))


def _full_spec(shape):
    nd = len(shape)
    return pl.BlockSpec(shape, lambda i, _nd=nd: (0,) * _nd)


# ----------------------------------------------------------------------------
# In-kernel helpers (traced inline)
# ----------------------------------------------------------------------------
def _row_shift(x, d, block):
    """result[(b, r), :] = x[(b, r+d), :] if 0 <= r+d < block else 0.

    Rows of x are grouped as (b, r) with r in [0, block); block is a power of 2.
    """
    n, width = x.shape
    z = jnp.zeros((abs(d), width), x.dtype)
    if d > 0:
        y = jnp.concatenate([x[d:, :], z], axis=0)
    else:
        y = jnp.concatenate([z, x[: n + d, :]], axis=0)
    rid = lax.broadcasted_iota(jnp.int32, (n, width), 0)
    rpos = rid & (block - 1)
    valid = jnp.logical_and(rpos + d >= 0, rpos + d < block)
    return jnp.where(valid, y, jnp.zeros_like(y))


def _bn_stats(y, c, count):
    """Training-mode BN stats per channel (lane % c), tiled back to y's width.

    One pass: sum and sum-of-squares, var = E[x^2] - E[x]^2 (biased, as torch).
    Returns (mean_tiled, inv_std_tiled), both (1, y.shape[1]).
    """
    width = y.shape[1]
    reps = width // c
    s1 = jnp.sum(y, axis=0, keepdims=True)
    s2 = jnp.sum(y * y, axis=0, keepdims=True)
    c1 = s1[:, 0:c]
    c2 = s2[:, 0:c]
    for k in range(1, reps):
        c1 = c1 + s1[:, k * c:(k + 1) * c]
        c2 = c2 + s2[:, k * c:(k + 1) * c]
    mean = c1 * (1.0 / count)
    var = c2 * (1.0 / count) - mean * mean
    inv = lax.rsqrt(var + EPS)
    mean_t = jnp.concatenate([mean] * reps, axis=1)
    inv_t = jnp.concatenate([inv] * reps, axis=1)
    return mean_t, inv_t


# ----------------------------------------------------------------------------
# Fused generator kernel
# ----------------------------------------------------------------------------
def _generator_kernel(x_ref, w0_ref, b0_ref, g0_ref, beta0_ref,
                      rhs1_ref, g1_ref, beta1_ref, rhs2_ref, b2_ref,
                      o_ref, h0_scr, *, B, S, C0, C1):
    L0 = S * C0

    # ---- init block: ConvTranspose on a 1x1 map == matmul -------------------
    y0 = jnp.dot(x_ref[...], w0_ref[...],
                 preferred_element_type=jnp.float32)           # (B, S*S*C0)
    # relayout (B, S*S*C0) -> (B*S, S*C0) through a VMEM scratch:
    # rows become (b, image-row i), lanes are (image-col j, channel c).
    for b in range(B):
        for i in range(S):
            h0_scr[b * S + i:b * S + i + 1, :] = y0[b:b + 1, i * L0:(i + 1) * L0]
    h = h0_scr[...] + b0_ref[...]     # conv bias (cancels under train BN; kept for fidelity)
    mean0, inv0 = _bn_stats(h, C0, B * S * S)
    h = (h - mean0) * inv0 * g0_ref[...] + beta0_ref[...]
    h = jnp.where(h >= 0, h, LEAKY * h)                        # (B*S, S*C0)

    # ---- deconv_0: ConvT(k4,s2,p1,bias=False) + BN + LeakyReLU --------------
    # One matmul: LHS lane blocks = [rows shifted -1 | 0 | +1]; the horizontal
    # convolution and output-row parity live inside the packed RHS.
    l1 = jnp.concatenate([_row_shift(h, -1, S), h, _row_shift(h, 1, S)], axis=1)
    y1 = jnp.dot(l1, rhs1_ref[...],
                 preferred_element_type=jnp.float32)           # (B*S, 2*(2S)*C1)
    mean1, inv1 = _bn_stats(y1, C1, B * (2 * S) * (2 * S))
    y1 = (y1 - mean1) * inv1 * g1_ref[...] + beta1_ref[...]
    y1 = jnp.where(y1 >= 0, y1, LEAKY * y1)

    # ---- deconv_1: ConvT(k4,s2,p1,bias=True) + Tanh -------------------------
    w1o = 2 * S * C1
    h1_even = y1[:, :w1o]          # feature-map rows 2m   of the 2S x 2S map
    h1_odd = y1[:, w1o:]           # feature-map rows 2m+1
    l2 = jnp.concatenate(
        [_row_shift(h1_odd, -1, S), h1_even, h1_odd, _row_shift(h1_even, 1, S)],
        axis=1)
    y2 = jnp.dot(l2, rhs2_ref[...],
                 preferred_element_type=jnp.float32)           # (B*S, 4*(4S)*Cn)
    o_ref[...] = jnp.tanh(y2 + b2_ref[...])


# ----------------------------------------------------------------------------
# One-time weight repacking (outside the jitted forward)
# ----------------------------------------------------------------------------
def _band_matrix(w, py, dy, w_in):
    """Fold the horizontal part of ConvTranspose2d(k=4,s=2,p=1) into a matrix.

    Returns A of shape (w_in*Cin, 2*w_in*Cout) with
      A[(j, ci), (2n+px, co)] = w[ci, co, _KIDX[py][dy], _KIDX[px][dx]]
    whenever j = n + px + dx - 1 (column halo handled by absent rows == zero pad).
    """
    cin, cout = w.shape[0], w.shape[1]
    ky = _KIDX[py][dy]
    a = jnp.zeros((w_in * cin, 2 * w_in * cout), w.dtype)
    for n in range(w_in):
        for px in range(2):
            for dx in range(2):
                j = n + px + dx - 1
                if 0 <= j < w_in:
                    kx = _KIDX[px][dx]
                    a = a.at[j * cin:(j + 1) * cin,
                             (2 * n + px) * cout:(2 * n + px + 1) * cout].set(
                                 w[:, :, ky, kx])
    return a


def _pack_rhs1(w1, s):
    c0, c1 = w1.shape[0], w1.shape[1]
    k, n = s * c0, 2 * s * c1
    a = {(py, dy): _band_matrix(w1, py, dy, s) for py in range(2) for dy in range(2)}
    z = jnp.zeros((k, n), w1.dtype)
    # LHS lane blocks: [shift(-1) | shift(0) | shift(+1)]
    # out lane blocks: [output rows 2m | output rows 2m+1]
    return jnp.concatenate([
        jnp.concatenate([a[0, 0], z], axis=1),
        jnp.concatenate([a[0, 1], a[1, 0]], axis=1),
        jnp.concatenate([z, a[1, 1]], axis=1)], axis=0)


def _pack_rhs2(w2, s):
    c1, cn = w2.shape[0], w2.shape[1]
    w_in = 2 * s
    k, n = w_in * c1, 2 * w_in * cn
    a = {(qy, dy): _band_matrix(w2, qy, dy, w_in) for qy in range(2) for dy in range(2)}
    z = jnp.zeros((k, n), w2.dtype)
    # LHS lane blocks: [shift(h1_odd,-1) | h1_even | h1_odd | shift(h1_even,+1)]
    # out lane blocks: final image row residue R (image row = 4*m + R), R = 0..3
    return jnp.concatenate([
        jnp.concatenate([a[0, 0], z,       z,       z      ], axis=1),
        jnp.concatenate([a[0, 1], a[1, 0], a[0, 0], z      ], axis=1),
        jnp.concatenate([z,       a[1, 1], a[0, 1], a[1, 0]], axis=1),
        jnp.concatenate([z,       z,       z,       a[1, 1]], axis=1)], axis=0)


def pack_generator_params(p, *, init_size):
    """One-time repack of PyTorch-layout params into the fused-kernel layout."""
    s = init_size
    z, c0 = p["w0"].shape[0], p["w0"].shape[1]
    c1 = p["w1"].shape[1]
    cn = p["w2"].shape[1]
    return dict(
        w0flat=jnp.transpose(p["w0"], (0, 2, 3, 1)).reshape(z, s * s * c0),
        b0t=jnp.tile(p["b0"], s).reshape(1, s * c0),
        g0t=jnp.tile(p["g0"], s).reshape(1, s * c0),
        beta0t=jnp.tile(p["beta0"], s).reshape(1, s * c0),
        rhs1=_pack_rhs1(p["w1"], s),
        g1t=jnp.tile(p["g1"], 4 * s).reshape(1, 4 * s * c1),
        beta1t=jnp.tile(p["beta1"], 4 * s).reshape(1, 4 * s * c1),
        rhs2=_pack_rhs2(p["w2"], s),
        b2t=jnp.tile(p["b2"], 16 * s).reshape(1, 16 * s * cn),
    )


# ----------------------------------------------------------------------------
# Jitted forward: one pallas_call, then a contiguous (free) reshape to NHWC.
# ----------------------------------------------------------------------------
@functools.partial(jax.jit, static_argnames=("init_size",))
def generator_forward(x, packed, *, init_size):
    B = x.shape[0]
    S = init_size
    C0 = packed["b0t"].shape[1] // S
    C1 = packed["g1t"].shape[1] // (4 * S)
    Cn = packed["b2t"].shape[1] // (16 * S)
    out_w = 4 * (4 * S) * Cn

    args = (x, packed["w0flat"], packed["b0t"], packed["g0t"], packed["beta0t"],
            packed["rhs1"], packed["g1t"], packed["beta1t"],
            packed["rhs2"], packed["b2t"])
    kern = functools.partial(_generator_kernel, B=B, S=S, C0=C0, C1=C1)
    y = pl.pallas_call(
        kern,
        out_shape=jax.ShapeDtypeStruct((B * S, out_w), jnp.float32),
        grid=(1,),
        in_specs=[_full_spec(a.shape) for a in args],
        out_specs=_full_spec((B * S, out_w)),
        scratch_shapes=[pltpu.VMEM((B * S, S * C0), jnp.float32)],
    )(*args)
    # rows are (b, m); lanes are (row residue R, image col, channel) with
    # image row = 4*m + R  ->  a contiguous reshape yields NHWC directly.
    return y.reshape(B, 4 * S, 4 * S, Cn)


# ----------------------------------------------------------------------------
# Pure-JAX NCHW reference (mirrors the PyTorch module in training mode)
# ----------------------------------------------------------------------------
def _bn_train(x, gamma, beta):
    mean = jnp.mean(x, axis=(0, 2, 3), keepdims=True)
    var = jnp.mean((x - mean) ** 2, axis=(0, 2, 3), keepdims=True)
    y = (x - mean) * lax.rsqrt(var + EPS)
    return y * gamma[None, :, None, None] + beta[None, :, None, None]


def _convT_ref(x, w, stride=2, pad=1):
    k = w.shape[2]
    wf = jnp.transpose(jnp.flip(w, axis=(2, 3)), (1, 0, 2, 3))  # (Cout,Cin,k,k)
    return lax.conv_general_dilated(
        x, wf, window_strides=(1, 1),
        padding=[(k - 1 - pad, k - 1 - pad)] * 2,
        lhs_dilation=(stride, stride),
        dimension_numbers=('NCHW', 'OIHW', 'NCHW'))


def reference_forward(x, p):
    h = jnp.einsum('bz,zcij->bcij', x, p['w0']) + p['b0'][None, :, None, None]
    h = _bn_train(h, p['g0'], p['beta0'])
    h = jnp.where(h >= 0, h, LEAKY * h)
    h = _convT_ref(h, p['w1'])
    h = _bn_train(h, p['g1'], p['beta1'])
    h = jnp.where(h >= 0, h, LEAKY * h)
    h = _convT_ref(h, p['w2']) + p['b2'][None, :, None, None]
    return jnp.tanh(h)


# ----------------------------------------------------------------------------
if __name__ == "__main__":
    # Small config: img_size=16, latent=32, n_gf=8, levels=2, n_c=3
    img_size, latent, n_gf, levels, n_c = 16, 32, 8, 2, 3
    B = 2
    S = img_size // 2 ** levels        # init_size = 4
    C0 = n_gf * 2 ** levels            # 32
    C1 = n_gf * 2 ** (levels - 1)      # 16

    key = jax.random.PRNGKey(0)
    ks = jax.random.split(key, 8)
    params = dict(
        w0=0.02 * jax.random.normal(ks[0], (latent, C0, S, S), jnp.float32),
        b0=0.02 * jax.random.normal(ks[1], (C0,), jnp.float32),
        g0=1.0 + 0.02 * jax.random.normal(ks[2], (C0,), jnp.float32),
        beta0=jnp.zeros((C0,), jnp.float32),
        w1=0.02 * jax.random.normal(ks[3], (C0, C1, 4, 4), jnp.float32),
        g1=1.0 + 0.02 * jax.random.normal(ks[4], (C1,), jnp.float32),
        beta1=jnp.zeros((C1,), jnp.float32),
        w2=0.02 * jax.random.normal(ks[5], (C1, n_c, 4, 4), jnp.float32),
        b2=0.02 * jax.random.normal(ks[6], (n_c,), jnp.float32),
    )
    x = jax.random.normal(ks[7], (B, latent), jnp.float32)

    packed = pack_generator_params(params, init_size=S)   # one-time repack
    out_nhwc = generator_forward(x, packed, init_size=S)
    out_nhwc = jax.block_until_ready(out_nhwc)
    assert out_nhwc.shape == (B, img_size, img_size, n_c)

    ref_nchw = reference_forward(x, params)
    np.testing.assert_allclose(np.asarray(out_nhwc.transpose(0, 3, 1, 2)),
                               np.asarray(ref_nchw), rtol=2e-3, atol=2e-3)
    print("KERNEL_OK")
</pallas_src>

<mosaic_0001>
module attributes {stable_mosaic.version = 11 : i64} {
  func.func @_generator_kernel(%arg0: i32, %arg1: memref<2x32xf32, #tpu.memory_space<vmem>>, %arg2: memref<32x512xf32, #tpu.memory_space<vmem>>, %arg3: memref<1x128xf32, #tpu.memory_space<vmem>>, %arg4: memref<1x128xf32, #tpu.memory_space<vmem>>, %arg5: memref<1x128xf32, #tpu.memory_space<vmem>>, %arg6: memref<384x256xf32, #tpu.memory_space<vmem>>, %arg7: memref<1x256xf32, #tpu.memory_space<vmem>>, %arg8: memref<1x256xf32, #tpu.memory_space<vmem>>, %arg9: memref<512x192xf32, #tpu.memory_space<vmem>>, %arg10: memref<1x192xf32, #tpu.memory_space<vmem>>, %arg11: memref<8x192xf32, #tpu.memory_space<vmem>>, %arg12: memref<8x128xf32, #tpu.memory_space<vmem>>) attributes {dimension_semantics = [#tpu.dimension_semantics<arbitrary>], iteration_bounds = array<i64: 1>, scalar_prefetch = 0 : i64, scratch_operands = 1 : i64, tpu.core_type = #tpu.core_type<tc>, window_params = [{pipeline_mode = #tpu.pipeline_mode<synchronous>, transform_indices = @transform_0, window_bounds = array<i64: 2, 32>}, {pipeline_mode = #tpu.pipeline_mode<synchronous>, transform_indices = @transform_1, window_bounds = array<i64: 32, 512>}, {pipeline_mode = #tpu.pipeline_mode<synchronous>, transform_indices = @transform_2, window_bounds = array<i64: 1, 128>}, {pipeline_mode = #tpu.pipeline_mode<synchronous>, transform_indices = @transform_3, window_bounds = array<i64: 1, 128>}, {pipeline_mode = #tpu.pipeline_mode<synchronous>, transform_indices = @transform_4, window_bounds = array<i64: 1, 128>}, {pipeline_mode = #tpu.pipeline_mode<synchronous>, transform_indices = @transform_5, window_bounds = array<i64: 384, 256>}, {pipeline_mode = #tpu.pipeline_mode<synchronous>, transform_indices = @transform_6, window_bounds = array<i64: 1, 256>}, {pipeline_mode = #tpu.pipeline_mode<synchronous>, transform_indices = @transform_7, window_bounds = array<i64: 1, 256>}, {pipeline_mode = #tpu.pipeline_mode<synchronous>, transform_indices = @transform_8, window_bounds = array<i64: 512, 192>}, {pipeline_mode = #tpu.pipeline_mode<synchronous>, transform_indices = @transform_9, window_bounds = array<i64: 1, 192>}, {pipeline_mode = #tpu.pipeline_mode<synchronous>, transform_indices = @transform_10, window_bounds = array<i64: 8, 192>}]} {
    %c0 = arith.constant 0 : index
    %c0_0 = arith.constant 0 : index
    %0 = vector.load %arg1[%c0, %c0_0] : memref<2x32xf32, #tpu.memory_space<vmem>>, vector<2x32xf32>
    %c0_1 = arith.constant 0 : index
    %c0_2 = arith.constant 0 : index
    %1 = vector.load %arg2[%c0_1, %c0_2] : memref<32x512xf32, #tpu.memory_space<vmem>>, vector<32x512xf32>
    %cst = arith.constant dense<0.000000e+00> : vector<2x512xf32>
    %2 = tpu.matmul %0, %1, %cst {dimension_numbers = #tpu.dot_dimension_numbers<[1], [0], [0], [1], [0, 0, 1, 1], [], []>} : vector<2x32xf32>, vector<32x512xf32>, vector<2x512xf32> -> vector<2x512xf32>
    %3 = vector.extract_strided_slice %2 {offsets = [0, 0], sizes = [1, 128], strides = [1, 1]} : vector<2x512xf32> to vector<1x128xf32>
    %c0_3 = arith.constant 0 : index
    %c0_4 = arith.constant 0 : index
    %4 = vector.load %arg12[%c0_3, %c0_4] : memref<8x128xf32, #tpu.memory_space<vmem>>, vector<1x128xf32>
    tpu.vector_store %arg12[%c0_3, %c0_4], %3 {strides = array<i32>} : memref<8x128xf32, #tpu.memory_space<vmem>>, vector<1x128xf32>,
    %5 = vector.extract_strided_slice %2 {offsets = [0, 128], sizes = [1, 128], strides = [1, 1]} : vector<2x512xf32> to vector<1x128xf32>
    %c1 = arith.constant 1 : index
    %c0_5 = arith.constant 0 : index
    %6 = vector.load %arg12[%c1, %c0_5] : memref<8x128xf32, #tpu.memory_space<vmem>>, vector<1x128xf32>
    tpu.vector_store %arg12[%c1, %c0_5], %5 {strides = array<i32>} : memref<8x128xf32, #tpu.memory_space<vmem>>, vector<1x128xf32>,
    %7 = vector.extract_strided_slice %2 {offsets = [0, 256], sizes = [1, 128], strides = [1, 1]} : vector<2x512xf32> to vector<1x128xf32>
    %c2 = arith.constant 2 : index
    %c0_6 = arith.constant 0 : index
    %8 = vector.load %arg12[%c2, %c0_6] : memref<8x128xf32, #tpu.memory_space<vmem>>, vector<1x128xf32>
    tpu.vector_store %arg12[%c2, %c0_6], %7 {strides = array<i32>} : memref<8x128xf32, #tpu.memory_space<vmem>>, vector<1x128xf32>,
    %9 = vector.extract_strided_slice %2 {offsets = [0, 384], sizes = [1, 128], strides = [1, 1]} : vector<2x512xf32> to vector<1x128xf32>
    %c3 = arith.constant 3 : index
    %c0_7 = arith.constant 0 : index
    %10 = vector.load %arg12[%c3, %c0_7] : memref<8x128xf32, #tpu.memory_space<vmem>>, vector<1x128xf32>
    tpu.vector_store %arg12[%c3, %c0_7], %9 {strides = array<i32>} : memref<8x128xf32, #tpu.memory_space<vmem>>, vector<1x128xf32>,
    %11 = vector.extract_strided_slice %2 {offsets = [1, 0], sizes = [1, 128], strides = [1, 1]} : vector<2x512xf32> to vector<1x128xf32>
    %c4 = arith.constant 4 : index
    %c0_8 = arith.constant 0 : index
    %12 = vector.load %arg12[%c4, %c0_8] : memref<8x128xf32, #tpu.memory_space<vmem>>, vector<1x128xf32>
    tpu.vector_store %arg12[%c4, %c0_8], %11 {strides = array<i32>} : memref<8x128xf32, #tpu.memory_space<vmem>>, vector<1x128xf32>,
    %13 = vector.extract_strided_slice %2 {offsets = [1, 128], sizes = [1, 128], strides = [1, 1]} : vector<2x512xf32> to vector<1x128xf32>
    %c5 = arith.constant 5 : index
    %c0_9 = arith.constant 0 : index
    %14 = vector.load %arg12[%c5, %c0_9] : memref<8x128xf32, #tpu.memory_space<vmem>>, vector<1x128xf32>
    tpu.vector_store %arg12[%c5, %c0_9], %13 {strides = array<i32>} : memref<8x128xf32, #tpu.memory_space<vmem>>, vector<1x128xf32>,
    %15 = vector.extract_strided_slice %2 {offsets = [1, 256], sizes = [1, 128], strides = [1, 1]} : vector<2x512xf32> to vector<1x128xf32>
    %c6 = arith.constant 6 : index
    %c0_10 = arith.constant 0 : index
    %16 = vector.load %arg12[%c6, %c0_10] : memref<8x128xf32, #tpu.memory_space<vmem>>, vector<1x128xf32>
    tpu.vector_store %arg12[%c6, %c0_10], %15 {strides = array<i32>} : memref<8x128xf32, #tpu.memory_space<vmem>>, vector<1x128xf32>,
    %17 = vector.extract_strided_slice %2 {offsets = [1, 384], sizes = [1, 128], strides = [1, 1]} : vector<2x512xf32> to vector<1x128xf32>
    %c7 = arith.constant 7 : index
    %c0_11 = arith.constant 0 : index
    %18 = vector.load %arg12[%c7, %c0_11] : memref<8x128xf32, #tpu.memory_space<vmem>>, vector<1x128xf32>
    tpu.vector_store %arg12[%c7, %c0_11], %17 {strides = array<i32>} : memref<8x128xf32, #tpu.memory_space<vmem>>, vector<1x128xf32>,
    %c0_12 = arith.constant 0 : index
    %c0_13 = arith.constant 0 : index
    %19 = vector.load %arg12[%c0_12, %c0_13] : memref<8x128xf32, #tpu.memory_space<vmem>>, vector<8x128xf32>
    %c0_14 = arith.constant 0 : index
    %c0_15 = arith.constant 0 : index
    %20 = vector.load %arg3[%c0_14, %c0_15] : memref<1x128xf32, #tpu.memory_space<vmem>>, vector<1x128xf32>
    %21 = vector.broadcast %20 : vector<1x128xf32> to vector<8x128xf32>
    %22 = arith.addf %19, %21 : vector<8x128xf32>
    %cst_16 = arith.constant dense<0.000000e+00> : vector<128xf32>
    %23 = vector.multi_reduction <add>, %22, %cst_16 [0] : vector<8x128xf32> to vector<128xf32>
    %24 = vector.shape_cast %23 : vector<128xf32> to vector<1x128xf32>
    %25 = arith.mulf %22, %22 : vector<8x128xf32>
    %cst_17 = arith.constant dense<0.000000e+00> : vector<128xf32>
    %26 = vector.multi_reduction <add>, %25, %cst_17 [0] : vector<8x128xf32> to vector<128xf32>
    %27 = vector.shape_cast %26 : vector<128xf32> to vector<1x128xf32>
    %28 = vector.extract_strided_slice %24 {offsets = [0, 0], sizes = [1, 32], strides = [1, 1]} : vector<1x128xf32> to vector<1x32xf32>
    %29 = vector.extract_strided_slice %27 {offsets = [0, 0], sizes = [1, 32], strides = [1, 1]} : vector<1x128xf32> to vector<1x32xf32>
    %30 = vector.extract_strided_slice %24 {offsets = [0, 32], sizes = [1, 32], strides = [1, 1]} : vector<1x128xf32> to vector<1x32xf32>
    %31 = arith.addf %28, %30 : vector<1x32xf32>
    %32 = vector.extract_strided_slice %27 {offsets = [0, 32], sizes = [1, 32], strides = [1, 1]} : vector<1x128xf32> to vector<1x32xf32>
    %33 = arith.addf %29, %32 : vector<1x32xf32>
    %34 = vector.extract_strided_slice %24 {offsets = [0, 64], sizes = [1, 32], strides = [1, 1]} : vector<1x128xf32> to vector<1x32xf32>
    %35 = arith.addf %31, %34 : vector<1x32xf32>
    %36 = vector.extract_strided_slice %27 {offsets = [0, 64], sizes = [1, 32], strides = [1, 1]} : vector<1x128xf32> to vector<1x32xf32>
    %37 = arith.addf %33, %36 : vector<1x32xf32>
    %38 = vector.extract_strided_slice %24 {offsets = [0, 96], sizes = [1, 32], strides = [1, 1]} : vector<1x128xf32> to vector<1x32xf32>
    %39 = arith.addf %35, %38 : vector<1x32xf32>
    %40 = vector.extract_strided_slice %27 {offsets = [0, 96], sizes = [1, 32], strides = [1, 1]} : vector<1x128xf32> to vector<1x32xf32>
    %41 = arith.addf %37, %40 : vector<1x32xf32>
    %cst_18 = arith.constant 3.125000e-02 : f32
    %42 = vector.broadcast %cst_18 : f32 to vector<1x32xf32>
    %43 = arith.mulf %39, %42 : vector<1x32xf32>
    %cst_19 = arith.constant 3.125000e-02 : f32
    %44 = vector.broadcast %cst_19 : f32 to vector<1x32xf32>
    %45 = arith.mulf %41, %44 : vector<1x32xf32>
    %46 = arith.mulf %43, %43 : vector<1x32xf32>
    %47 = arith.subf %45, %46 : vector<1x32xf32>
    %cst_20 = arith.constant 9.99999974E-6 : f32
    %48 = vector.broadcast %cst_20 : f32 to vector<1x32xf32>
    %49 = arith.addf %47, %48 : vector<1x32xf32>
    %50 = math.rsqrt %49 : vector<1x32xf32>
    %51 = tpu.concatenate %43, %43, %43, %43 in 1 : vector<1x32xf32>, vector<1x32xf32>, vector<1x32xf32>, vector<1x32xf32> -> vector<1x128xf32>
    %52 = tpu.concatenate %50, %50, %50, %50 in 1 : vector<1x32xf32>, vector<1x32xf32>, vector<1x32xf32>, vector<1x32xf32> -> vector<1x128xf32>
    %53 = vector.broadcast %51 : vector<1x128xf32> to vector<8x128xf32>
    %54 = arith.subf %22, %53 : vector<8x128xf32>
    %55 = vector.broadcast %52 : vector<1x128xf32> to vector<8x128xf32>
    %56 = arith.mulf %54, %55 : vector<8x128xf32>
    %c0_21 = arith.constant 0 : index
    %c0_22 = arith.constant 0 : index
    %57 = vector.load %arg4[%c0_21, %c0_22] : memref<1x128xf32, #tpu.memory_space<vmem>>, vector<1x128xf32>
    %58 = vector.broadcast %57 : vector<1x128xf32> to vector<8x128xf32>
    %59 = arith.mulf %56, %58 : vector<8x128xf32>
    %c0_23 = arith.constant 0 : index
    %c0_24 = arith.constant 0 : index
    %60 = vector.load %arg5[%c0_23, %c0_24] : memref<1x128xf32, #tpu.memory_space<vmem>>, vector<1x128xf32>
    %61 = vector.broadcast %60 : vector<1x128xf32> to vector<8x128xf32>
    %62 = arith.addf %59, %61 : vector<8x128xf32>
    %cst_25 = arith.constant 0.000000e+00 : f32
    %63 = vector.broadcast %cst_25 : f32 to vector<8x128xf32>
    %64 = arith.cmpf oge, %62, %63 : vector<8x128xf32>
    %cst_26 = arith.constant 2.000000e-01 : f32
    %65 = vector.broadcast %cst_26 : f32 to vector<8x128xf32>
    %66 = arith.mulf %65, %62 : vector<8x128xf32>
    %67 = arith.select %64, %62, %66 : vector<8x128xi1>, vector<8x128xf32>
    %cst_27 = arith.constant 0.000000e+00 : f32
    %68 = vector.broadcast %cst_27 : f32 to vector<1x128xf32>
    %69 = vector.extract_strided_slice %67 {offsets = [0, 0], sizes = [7, 128], strides = [1, 1]} : vector<8x128xf32> to vector<7x128xf32>
    %70 = tpu.concatenate %68, %69 in 0 : vector<1x128xf32>, vector<7x128xf32> -> vector<8x128xf32>
    %71 = tpu.iota {dimensions = array<i32: 0>} : vector<8x128xi32>
    %c3_i32 = arith.constant 3 : i32
    %72 = vector.broadcast %c3_i32 : i32 to vector<8x128xi32>
    %73 = arith.andi %71, %72 : vector<8x128xi32>
    %c-1_i32 = arith.constant -1 : i32
    %74 = vector.broadcast %c-1_i32 : i32 to vector<8x128xi32>
    %75 = arith.addi %73, %74 : vector<8x128xi32>
    %c0_i32 = arith.constant 0 : i32
    %76 = vector.broadcast %c0_i32 : i32 to vector<8x128xi32>
    %77 = arith.cmpi sge, %75, %76 : vector<8x128xi32>
    %c-1_i32_28 = arith.constant -1 : i32
    %78 = vector.broadcast %c-1_i32_28 : i32 to vector<8x128xi32>
    %79 = arith.addi %73, %78 : vector<8x128xi32>
    %c4_i32 = arith.constant 4 : i32
    %80 = vector.broadcast %c4_i32 : i32 to vector<8x128xi32>
    %81 = arith.cmpi slt, %79, %80 : vector<8x128xi32>
    %82 = arith.andi %77, %81 : vector<8x128xi1>
    %cst_29 = arith.constant 0.000000e+00 : f32
    %83 = vector.broadcast %cst_29 : f32 to vector<8x128xf32>
    %84 = arith.select %82, %70, %83 : vector<8x128xi1>, vector<8x128xf32>
    %cst_30 = arith.constant 0.000000e+00 : f32
    %85 = vector.broadcast %cst_30 : f32 to vector<1x128xf32>
    %86 = vector.extract_strided_slice %67 {offsets = [1, 0], sizes = [7, 128], strides = [1, 1]} : vector<8x128xf32> to vector<7x128xf32>
    %87 = tpu.concatenate %86, %85 in 0 : vector<7x128xf32>, vector<1x128xf32> -> vector<8x128xf32>
    %88 = tpu.iota {dimensions = array<i32: 0>} : vector<8x128xi32>
    %c3_i32_31 = arith.constant 3 : i32
    %89 = vector.broadcast %c3_i32_31 : i32 to vector<8x128xi32>
    %90 = arith.andi %88, %89 : vector<8x128xi32>
    %c1_i32 = arith.constant 1 : i32
    %91 = vector.broadcast %c1_i32 : i32 to vector<8x128xi32>
    %92 = arith.addi %90, %91 : vector<8x128xi32>
    %c0_i32_32 = arith.constant 0 : i32
    %93 = vector.broadcast %c0_i32_32 : i32 to vector<8x128xi32>
    %94 = arith.cmpi sge, %92, %93 : vector<8x128xi32>
    %c1_i32_33 = arith.constant 1 : i32
    %95 = vector.broadcast %c1_i32_33 : i32 to vector<8x128xi32>
    %96 = arith.addi %90, %95 : vector<8x128xi32>
    %c4_i32_34 = arith.constant 4 : i32
    %97 = vector.broadcast %c4_i32_34 : i32 to vector<8x128xi32>
    %98 = arith.cmpi slt, %96, %97 : vector<8x128xi32>
    %99 = arith.andi %94, %98 : vector<8x128xi1>
    %cst_35 = arith.constant 0.000000e+00 : f32
    %100 = vector.broadcast %cst_35 : f32 to vector<8x128xf32>
    %101 = arith.select %99, %87, %100 : vector<8x128xi1>, vector<8x128xf32>
    %102 = tpu.concatenate %84, %67, %101 in 1 : vector<8x128xf32>, vector<8x128xf32>, vector<8x128xf32> -> vector<8x384xf32>
    %c0_36 = arith.constant 0 : index
    %c0_37 = arith.constant 0 : index
    %103 = vector.load %arg6[%c0_36, %c0_37] : memref<384x256xf32, #tpu.memory_space<vmem>>, vector<384x256xf32>
    %cst_38 = arith.constant dense<0.000000e+00> : vector<8x256xf32>
    %104 = tpu.matmul %102, %103, %cst_38 {dimension_numbers = #tpu.dot_dimension_numbers<[1], [0], [0], [1], [0, 0, 1, 1], [], []>} : vector<8x384xf32>, vector<384x256xf32>, vector<8x256xf32> -> vector<8x256xf32>
    %cst_39 = arith.constant dense<0.000000e+00> : vector<256xf32>
    %105 = vector.multi_reduction <add>, %104, %cst_39 [0] : vector<8x256xf32> to vector<256xf32>
    %106 = vector.shape_cast %105 : vector<256xf32> to vector<1x256xf32>
    %107 = arith.mulf %104, %104 : vector<8x256xf32>
    %cst_40 = arith.constant dense<0.000000e+00> : vector<256xf32>
    %108 = vector.multi_reduction <add>, %107, %cst_40 [0] : vector<8x256xf32> to vector<256xf32>
    %109 = vector.shape_cast %108 : vector<256xf32> to vector<1x256xf32>
    %110 = vector.extract_strided_slice %106 {offsets = [0, 0], sizes = [1, 16], strides = [1, 1]} : vector<1x256xf32> to vector<1x16xf32>
    %111 = vector.extract_strided_slice %109 {offsets = [0, 0], sizes = [1, 16], strides = [1, 1]} : vector<1x256xf32> to vector<1x16xf32>
    %112 = vector.extract_strided_slice %106 {offsets = [0, 16], sizes = [1, 16], strides = [1, 1]} : vector<1x256xf32> to vector<1x16xf32>
    %113 = arith.addf %110, %112 : vector<1x16xf32>
    %114 = vector.extract_strided_slice %109 {offsets = [0, 16], sizes = [1, 16], strides = [1, 1]} : vector<1x256xf32> to vector<1x16xf32>
    %115 = arith.addf %111, %114 : vector<1x16xf32>
    %116 = vector.extract_strided_slice %106 {offsets = [0, 32], sizes = [1, 16], strides = [1, 1]} : vector<1x256xf32> to vector<1x16xf32>
    %117 = arith.addf %113, %116 : vector<1x16xf32>
    %118 = vector.extract_strided_slice %109 {offsets = [0, 32], sizes = [1, 16], strides = [1, 1]} : vector<1x256xf32> to vector<1x16xf32>
    %119 = arith.addf %115, %118 : vector<1x16xf32>
    %120 = vector.extract_strided_slice %106 {offsets = [0, 48], sizes = [1, 16], strides = [1, 1]} : vector<1x256xf32> to vector<1x16xf32>
    %121 = arith.addf %117, %120 : vector<1x16xf32>
    %122 = vector.extract_strided_slice %109 {offsets = [0, 48], sizes = [1, 16], strides = [1, 1]} : vector<1x256xf32> to vector<1x16xf32>
    %123 = arith.addf %119, %122 : vector<1x16xf32>
    %124 = vector.extract_strided_slice %106 {offsets = [0, 64], sizes = [1, 16], strides = [1, 1]} : vector<1x256xf32> to vector<1x16xf32>
    %125 = arith.addf %121, %124 : vector<1x16xf32>
    %126 = vector.extract_strided_slice %109 {offsets = [0, 64], sizes = [1, 16], strides = [1, 1]} : vector<1x256xf32> to vector<1x16xf32>
    %127 = arith.addf %123, %126 : vector<1x16xf32>
    %128 = vector.extract_strided_slice %106 {offsets = [0, 80], sizes = [1, 16], strides = [1, 1]} : vector<1x256xf32> to vector<1x16xf32>
    %129 = arith.addf %125, %128 : vector<1x16xf32>
    %130 = vector.extract_strided_slice %109 {offsets = [0, 80], sizes = [1, 16], strides = [1, 1]} : vector<1x256xf32> to vector<1x16xf32>
    %131 = arith.addf %127, %130 : vector<1x16xf32>
    %132 = vector.extract_strided_slice %106 {offsets = [0, 96], sizes = [1, 16], strides = [1, 1]} : vector<1x256xf32> to vector<1x16xf32>
    %133 = arith.addf %129, %132 : vector<1x16xf32>
    %134 = vector.extract_strided_slice %109 {offsets = [0, 96], sizes = [1, 16], strides = [1, 1]} : vector<1x256xf32> to vector<1x16xf32>
    %135 = arith.addf %131, %134 : vector<1x16xf32>
    %136 = vector.extract_strided_slice %106 {offsets = [0, 112], sizes = [1, 16], strides = [1, 1]} : vector<1x256xf32> to vector<1x16xf32>
    %137 = arith.addf %133, %136 : vector<1x16xf32>
    %138 = vector.extract_strided_slice %109 {offsets = [0, 112], sizes = [1, 16], strides = [1, 1]} : vector<1x256xf32> to vector<1x16xf32>
    %139 = arith.addf %135, %138 : vector<1x16xf32>
    %140 = vector.extract_strided_slice %106 {offsets = [0, 128], sizes = [1, 16], strides = [1, 1]} : vector<1x256xf32> to vector<1x16xf32>
    %141 = arith.addf %137, %140 : vector<1x16xf32>
    %142 = vector.extract_strided_slice %109 {offsets = [0, 128], sizes = [1, 16], strides = [1, 1]} : vector<1x256xf32> to vector<1x16xf32>
    %143 = arith.addf %139, %142 : vector<1x16xf32>
    %144 = vector.extract_strided_slice %106 {offsets = [0, 144], sizes = [1, 16], strides = [1, 1]} : vector<1x256xf32> to vector<1x16xf32>
    %145 = arith.addf %141, %144 : vector<1x16xf32>
    %146 = vector.extract_strided_slice %109 {offsets = [0, 144], sizes = [1, 16], strides = [1, 1]} : vector<1x256xf32> to vector<1x16xf32>
    %147 = arith.addf %143, %146 : vector<1x16xf32>
    %148 = vector.extract_strided_slice %106 {offsets = [0, 160], sizes = [1, 16], strides = [1, 1]} : vector<1x256xf32> to vector<1x16xf32>
    %149 = arith.addf %145, %148 : vector<1x16xf32>
    %150 = vector.extract_strided_slice %109 {offsets = [0, 160], sizes = [1, 16], strides = [1, 1]} : vector<1x256xf32> to vector<1x16xf32>
    %151 = arith.addf %147, %150 : vector<1x16xf32>
    %152 = vector.extract_strided_slice %106 {offsets = [0, 176], sizes = [1, 16], strides = [1, 1]} : vector<1x256xf32> to vector<1x16xf32>
    %153 = arith.addf %149, %152 : vector<1x16xf32>
    %154 = vector.extract_strided_slice %109 {offsets = [0, 176], sizes = [1, 16], strides = [1, 1]} : vector<1x256xf32> to vector<1x16xf32>
    %155 = arith.addf %151, %154 : vector<1x16xf32>
    %156 = vector.extract_strided_slice %106 {offsets = [0, 192], sizes = [1, 16], strides = [1, 1]} : vector<1x256xf32> to vector<1x16xf32>
    %157 = arith.addf %153, %156 : vector<1x16xf32>
    %158 = vector.extract_strided_slice %109 {offsets = [0, 192], sizes = [1, 16], strides = [1, 1]} : vector<1x256xf32> to vector<1x16xf32>
    %159 = arith.addf %155, %158 : vector<1x16xf32>
    %160 = vector.extract_strided_slice %106 {offsets = [0, 208], sizes = [1, 16], strides = [1, 1]} : vector<1x256xf32> to vector<1x16xf32>
    %161 = arith.addf %157, %160 : vector<1x16xf32>
    %162 = vector.extract_strided_slice %109 {offsets = [0, 208], sizes = [1, 16], strides = [1, 1]} : vector<1x256xf32> to vector<1x16xf32>
    %163 = arith.addf %159, %162 : vector<1x16xf32>
    %164 = vector.extract_strided_slice %106 {offsets = [0, 224], sizes = [1, 16], strides = [1, 1]} : vector<1x256xf32> to vector<1x16xf32>
    %165 = arith.addf %161, %164 : vector<1x16xf32>
    %166 = vector.extract_strided_slice %109 {offsets = [0, 224], sizes = [1, 16], strides = [1, 1]} : vector<1x256xf32> to vector<1x16xf32>
    %167 = arith.addf %163, %166 : vector<1x16xf32>
    %168 = vector.extract_strided_slice %106 {offsets = [0, 240], sizes = [1, 16], strides = [1, 1]} : vector<1x256xf32> to vector<1x16xf32>
    %169 = arith.addf %165, %168 : vector<1x16xf32>
    %170 = vector.extract_strided_slice %109 {offsets = [0, 240], sizes = [1, 16], strides = [1, 1]} : vector<1x256xf32> to vector<1x16xf32>
    %171 = arith.addf %167, %170 : vector<1x16xf32>
    %cst_41 = arith.constant 7.812500e-03 : f32
    %172 = vector.broadcast %cst_41 : f32 to vector<1x16xf32>
    %173 = arith.mulf %169, %172 : vector<1x16xf32>
    %cst_42 = arith.constant 7.812500e-03 : f32
    %174 = vector.broadcast %cst_42 : f32 to vector<1x16xf32>
    %175 = arith.mulf %171, %174 : vector<1x16xf32>
    %176 = arith.mulf %173, %173 : vector<1x16xf32>
    %177 = arith.subf %175, %176 : vector<1x16xf32>
    %cst_43 = arith.constant 9.99999974E-6 : f32
    %178 = vector.broadcast %cst_43 : f32 to vector<1x16xf32>
    %179 = arith.addf %177, %178 : vector<1x16xf32>
    %180 = math.rsqrt %179 : vector<1x16xf32>
    %181 = tpu.concatenate %173, %173, %173, %173, %173, %173, %173, %173, %173, %173, %173, %173, %173, %173, %173, %173 in 1 : vector<1x16xf32>, vector<1x16xf32>, vector<1x16xf32>, vector<1x16xf32>, vector<1x16xf32>, vector<1x16xf32>, vector<1x16xf32>, vector<1x16xf32>, vector<1x16xf32>, vector<1x16xf32>, vector<1x16xf32>, vector<1x16xf32>, vector<1x16xf32>, vector<1x16xf32>, vector<1x16xf32>, vector<1x16xf32> -> vector<1x256xf32>
    %182 = tpu.concatenate %180, %180, %180, %180, %180, %180, %180, %180, %180, %180, %180, %180, %180, %180, %180, %180 in 1 : vector<1x16xf32>, vector<1x16xf32>, vector<1x16xf32>, vector<1x16xf32>, vector<1x16xf32>, vector<1x16xf32>, vector<1x16xf32>, vector<1x16xf32>, vector<1x16xf32>, vector<1x16xf32>, vector<1x16xf32>, vector<1x16xf32>, vector<1x16xf32>, vector<1x16xf32>, vector<1x16xf32>, vector<1x16xf32> -> vector<1x256xf32>
    %183 = vector.broadcast %181 : vector<1x256xf32> to vector<8x256xf32>
    %184 = arith.subf %104, %183 : vector<8x256xf32>
    %185 = vector.broadcast %182 : vector<1x256xf32> to vector<8x256xf32>
    %186 = arith.mulf %184, %185 : vector<8x256xf32>
    %c0_44 = arith.constant 0 : index
    %c0_45 = arith.constant 0 : index
    %187 = vector.load %arg7[%c0_44, %c0_45] : memref<1x256xf32, #tpu.memory_space<vmem>>, vector<1x256xf32>
    %188 = vector.broadcast %187 : vector<1x256xf32> to vector<8x256xf32>
    %189 = arith.mulf %186, %188 : vector<8x256xf32>
    %c0_46 = arith.constant 0 : index
    %c0_47 = arith.constant 0 : index
    %190 = vector.load %arg8[%c0_46, %c0_47] : memref<1x256xf32, #tpu.memory_space<vmem>>, vector<1x256xf32>
    %191 = vector.broadcast %190 : vector<1x256xf32> to vector<8x256xf32>
    %192 = arith.addf %189, %191 : vector<8x256xf32>
    %cst_48 = arith.constant 0.000000e+00 : f32
    %193 = vector.broadcast %cst_48 : f32 to vector<8x256xf32>
    %194 = arith.cmpf oge, %192, %193 : vector<8x256xf32>
    %cst_49 = arith.constant 2.000000e-01 : f32
    %195 = vector.broadcast %cst_49 : f32 to vector<8x256xf32>
    %196 = arith.mulf %195, %192 : vector<8x256xf32>
    %197 = arith.select %194, %192, %196 : vector<8x256xi1>, vector<8x256xf32>
    %198 = vector.extract_strided_slice %197 {offsets = [0, 0], sizes = [8, 128], strides = [1, 1]} : vector<8x256xf32> to vector<8x128xf32>
    %199 = vector.extract_strided_slice %197 {offsets = [0, 128], sizes = [8, 128], strides = [1, 1]} : vector<8x256xf32> to vector<8x128xf32>
    %cst_50 = arith.constant 0.000000e+00 : f32
    %200 = vector.broadcast %cst_50 : f32 to vector<1x128xf32>
    %201 = vector.extract_strided_slice %199 {offsets = [0, 0], sizes = [7, 128], strides = [1, 1]} : vector<8x128xf32> to vector<7x128xf32>
    %202 = tpu.concatenate %200, %201 in 0 : vector<1x128xf32>, vector<7x128xf32> -> vector<8x128xf32>
    %203 = tpu.iota {dimensions = array<i32: 0>} : vector<8x128xi32>
    %c3_i32_51 = arith.constant 3 : i32
    %204 = vector.broadcast %c3_i32_51 : i32 to vector<8x128xi32>
    %205 = arith.andi %203, %204 : vector<8x128xi32>
    %c-1_i32_52 = arith.constant -1 : i32
    %206 = vector.broadcast %c-1_i32_52 : i32 to vector<8x128xi32>
    %207 = arith.addi %205, %206 : vector<8x128xi32>
    %c0_i32_53 = arith.constant 0 : i32
    %208 = vector.broadcast %c0_i32_53 : i32 to vector<8x128xi32>
    %209 = arith.cmpi sge, %207, %208 : vector<8x128xi32>
    %c-1_i32_54 = arith.constant -1 : i32
    %210 = vector.broadcast %c-1_i32_54 : i32 to vector<8x128xi32>
    %211 = arith.addi %205, %210 : vector<8x128xi32>
    %c4_i32_55 = arith.constant 4 : i32
    %212 = vector.broadcast %c4_i32_55 : i32 to vector<8x128xi32>
    %213 = arith.cmpi slt, %211, %212 : vector<8x128xi32>
    %214 = arith.andi %209, %213 : vector<8x128xi1>
    %cst_56 = arith.constant 0.000000e+00 : f32
    %215 = vector.broadcast %cst_56 : f32 to vector<8x128xf32>
    %216 = arith.select %214, %202, %215 : vector<8x128xi1>, vector<8x128xf32>
    %cst_57 = arith.constant 0.000000e+00 : f32
    %217 = vector.broadcast %cst_57 : f32 to vector<1x128xf32>
    %218 = vector.extract_strided_slice %198 {offsets = [1, 0], sizes = [7, 128], strides = [1, 1]} : vector<8x128xf32> to vector<7x128xf32>
    %219 = tpu.concatenate %218, %217 in 0 : vector<7x128xf32>, vector<1x128xf32> -> vector<8x128xf32>
    %220 = tpu.iota {dimensions = array<i32: 0>} : vector<8x128xi32>
    %c3_i32_58 = arith.constant 3 : i32
    %221 = vector.broadcast %c3_i32_58 : i32 to vector<8x128xi32>
    %222 = arith.andi %220, %221 : vector<8x128xi32>
    %c1_i32_59 = arith.constant 1 : i32
    %223 = vector.broadcast %c1_i32_59 : i32 to vector<8x128xi32>
    %224 = arith.addi %222, %223 : vector<8x128xi32>
    %c0_i32_60 = arith.constant 0 : i32
    %225 = vector.broadcast %c0_i32_60 : i32 to vector<8x128xi32>
    %226 = arith.cmpi sge, %224, %225 : vector<8x128xi32>
    %c1_i32_61 = arith.constant 1 : i32
    %227 = vector.broadcast %c1_i32_61 : i32 to vector<8x128xi32>
    %228 = arith.addi %222, %227 : vector<8x128xi32>
    %c4_i32_62 = arith.constant 4 : i32
    %229 = vector.broadcast %c4_i32_62 : i32 to vector<8x128xi32>
    %230 = arith.cmpi slt, %228, %229 : vector<8x128xi32>
    %231 = arith.andi %226, %230 : vector<8x128xi1>
    %cst_63 = arith.constant 0.000000e+00 : f32
    %232 = vector.broadcast %cst_63 : f32 to vector<8x128xf32>
    %233 = arith.select %231, %219, %232 : vector<8x128xi1>, vector<8x128xf32>
    %234 = tpu.concatenate %216, %198, %199, %233 in 1 : vector<8x128xf32>, vector<8x128xf32>, vector<8x128xf32>, vector<8x128xf32> -> vector<8x512xf32>
    %c0_64 = arith.constant 0 : index
    %c0_65 = arith.constant 0 : index
    %235 = vector.load %arg9[%c0_64, %c0_65] : memref<512x192xf32, #tpu.memory_space<vmem>>, vector<512x192xf32>
    %cst_66 = arith.constant dense<0.000000e+00> : vector<8x192xf32>
    %236 = tpu.matmul %234, %235, %cst_66 {dimension_numbers = #tpu.dot_dimension_numbers<[1], [0], [0], [1], [0, 0, 1, 1], [], []>} : vector<8x512xf32>, vector<512x192xf32>, vector<8x192xf32> -> vector<8x192xf32>
    %c0_67 = arith.constant 0 : index
    %c0_68 = arith.constant 0 : index
    %237 = vector.load %arg10[%c0_67, %c0_68] : memref<1x192xf32, #tpu.memory_space<vmem>>, vector<1x192xf32>
    %238 = vector.broadcast %237 : vector<1x192xf32> to vector<8x192xf32>
    %239 = arith.addf %236, %238 : vector<8x192xf32>
    %240 = math.tanh %239 : vector<8x192xf32>
    %c0_69 = arith.constant 0 : index
    %c0_70 = arith.constant 0 : index
    %241 = vector.load %arg11[%c0_69, %c0_70] : memref<8x192xf32, #tpu.memory_space<vmem>>, vector<8x192xf32>
    tpu.vector_store %arg11[%c0_69, %c0_70], %240 {strides = array<i32>} : memref<8x192xf32, #tpu.memory_space<vmem>>, vector<8x192xf32>,
    return
  }
  func.func @transform_0(%arg0: i32) -> (i32, i32) {
    %c0_i32 = arith.constant 0 : i32
    %c0_i32_0 = arith.constant 0 : i32
    %c0_i32_1 = arith.constant 0 : i32
    return %c0_i32, %c0_i32_0 : i32, i32
  }
  func.func @transform_1(%arg0: i32) -> (i32, i32) {
    %c0_i32 = arith.constant 0 : i32
    %c0_i32_0 = arith.constant 0 : i32
    %c0_i32_1 = arith.constant 0 : i32
    return %c0_i32, %c0_i32_0 : i32, i32
  }
  func.func @transform_2(%arg0: i32) -> (i32, i32) {
    %c0_i32 = arith.constant 0 : i32
    %c0_i32_0 = arith.constant 0 : i32
    %c0_i32_1 = arith.constant 0 : i32
    return %c0_i32, %c0_i32_0 : i32, i32
  }
  func.func @transform_3(%arg0: i32) -> (i32, i32) {
    %c0_i32 = arith.constant 0 : i32
    %c0_i32_0 = arith.constant 0 : i32
    %c0_i32_1 = arith.constant 0 : i32
    return %c0_i32, %c0_i32_0 : i32, i32
  }
  func.func @transform_4(%arg0: i32) -> (i32, i32) {
    %c0_i32 = arith.constant 0 : i32
    %c0_i32_0 = arith.constant 0 : i32
    %c0_i32_1 = arith.constant 0 : i32
    return %c0_i32, %c0_i32_0 : i32, i32
  }
  func.func @transform_5(%arg0: i32) -> (i32, i32) {
    %c0_i32 = arith.constant 0 : i32
    %c0_i32_0 = arith.constant 0 : i32
    %c0_i32_1 = arith.constant 0 : i32
    return %c0_i32, %c0_i32_0 : i32, i32
  }
  func.func @transform_6(%arg0: i32) -> (i32, i32) {
    %c0_i32 = arith.constant 0 : i32
    %c0_i32_0 = arith.constant 0 : i32
    %c0_i32_1 = arith.constant 0 : i32
    return %c0_i32, %c0_i32_0 : i32, i32
  }
  func.func @transform_7(%arg0: i32) -> (i32, i32) {
    %c0_i32 = arith.constant 0 : i32
    %c0_i32_0 = arith.constant 0 : i32
    %c0_i32_1 = arith.constant 0 : i32
    return %c0_i32, %c0_i32_0 : i32, i32
  }
  func.func @transform_8(%arg0: i32) -> (i32, i32) {
    %c0_i32 = arith.constant 0 : i32
    %c0_i32_0 = arith.constant 0 : i32
    %c0_i32_1 = arith.constant 0 : i32
    return %c0_i32, %c0_i32_0 : i32, i32
  }
  func.func @transform_9(%arg0: i32) -> (i32, i32) {
    %c0_i32 = arith.constant 0 : i32
    %c0_i32_0 = arith.constant 0 : i32
    %c0_i32_1 = arith.constant 0 : i32
    return %c0_i32, %c0_i32_0 : i32, i32
  }
  func.func @transform_10(%arg0: i32) -> (i32, i32) {
    %c0_i32 = arith.constant 0 : i32
    %c0_i32_0 = arith.constant 0 : i32
    %c0_i32_1 = arith.constant 0 : i32
    return %c0_i32, %c0_i32_0 : i32, i32
  }
}

</mosaic_0001>

<llo_original>
// kernel: generator_forward.1
$region0: #{generator_forward.1}
  #allocation0 [shape = 'u32[]', space=smem, size = 0x4, offset = 0x4, fixed_abs, tag = 'smem constant byte address 0x4 - core index']
  #allocation1 [shape = 'u32[144,128]{1,0:T(1,128)}', space=vmem, size = 0x12000, scoped, tag = 'internal scratch']
  #allocation2 [shape = 'f32[8,128]{1,0:T(8,128)}', space=vmem, size = 0x1000, scoped, tag = 'scratch operand']
  %s0 = inlined_call_operand.vmem [shape: f32[2,32], index: 0, kind: input, shape index: {}]
  %s1 = inlined_call_operand.vmem [shape: f32[32,512], index: 1, kind: input, shape index: {}]
  %s2 = inlined_call_operand.vmem [shape: f32[1,128], index: 2, kind: input, shape index: {}]
  %s3 = inlined_call_operand.vmem [shape: f32[1,128], index: 3, kind: input, shape index: {}]
  %s4 = inlined_call_operand.vmem [shape: f32[1,128], index: 4, kind: input, shape index: {}]
  %s5 = inlined_call_operand.vmem [shape: f32[384,256], index: 5, kind: input, shape index: {}]
  %s6 = inlined_call_operand.vmem [shape: f32[1,256], index: 6, kind: input, shape index: {}]
  %s7 = inlined_call_operand.vmem [shape: f32[1,256], index: 7, kind: input, shape index: {}]
  %s8 = inlined_call_operand.vmem [shape: f32[512,192], index: 8, kind: input, shape index: {}]
  %s9 = inlined_call_operand.vmem [shape: f32[1,192], index: 9, kind: input, shape index: {}]
  %s10 = inlined_call_operand.vmem [shape: f32[8,192], index: 10, kind: output, shape index: {}]
  %s11 = sld [smem:[#allocation0]]
  $region50: #{generator_forward.1} parent=0
    _
  %s13 = ssub.s32 1, %s11
  %s14 = scalar_select 0, %s13, %s11
  // Predicated region
  $region2: #{generator_forward.1} parent=0 // pred_check
    _
  $region3: #{generator_forward.1} parent=0 // pred_check_branch
    %16 = sbr.rel (0) target = $region5
  $region4: #{generator_forward.1} parent=0 // pred_region
    _
  $region5: #{generator_forward.1} parent=0 // pred_fallthru
    _
  // Predicated region
  $region6: #{generator_forward.1} parent=0 // pred_check
    _
  $region7: #{generator_forward.1} parent=0 // pred_check_branch
    %18 = sbr.rel (0) target = $region9
  $region8: #{generator_forward.1} parent=0 // pred_region
    _
  $region9: #{generator_forward.1} parent=0 // pred_fallthru
    _
  // Predicated region
  $region10: #{generator_forward.1} parent=0 // pred_check
    _
  $region11: #{generator_forward.1} parent=0 // pred_check_branch
    %20 = sbr.rel (0) target = $region13
  $region12: #{generator_forward.1} parent=0 // pred_region
    _
  $region13: #{generator_forward.1} parent=0 // pred_fallthru
    _
  // Predicated region
  $region14: #{generator_forward.1} parent=0 // pred_check
    _
  $region15: #{generator_forward.1} parent=0 // pred_check_branch
    %22 = sbr.rel (0) target = $region17
  $region16: #{generator_forward.1} parent=0 // pred_region
    _
  $region17: #{generator_forward.1} parent=0 // pred_fallthru
    _
  // Predicated region
  $region18: #{generator_forward.1} parent=0 // pred_check
    _
  $region19: #{generator_forward.1} parent=0 // pred_check_branch
    %24 = sbr.rel (0) target = $region21
  $region20: #{generator_forward.1} parent=0 // pred_region
    _
  $region21: #{generator_forward.1} parent=0 // pred_fallthru
    _
  // Predicated region
  $region22: #{generator_forward.1} parent=0 // pred_check
    _
  $region23: #{generator_forward.1} parent=0 // pred_check_branch
    %26 = sbr.rel (0) target = $region25
  $region24: #{generator_forward.1} parent=0 // pred_region
    _
  $region25: #{generator_forward.1} parent=0 // pred_fallthru
    _
  // Predicated region
  $region26: #{generator_forward.1} parent=0 // pred_check
    _
  $region27: #{generator_forward.1} parent=0 // pred_check_branch
    %28 = sbr.rel (0) target = $region29
  $region28: #{generator_forward.1} parent=0 // pred_region
    _
  $region29: #{generator_forward.1} parent=0 // pred_fallthru
    _
  // Predicated region
  $region30: #{generator_forward.1} parent=0 // pred_check
    _
  $region31: #{generator_forward.1} parent=0 // pred_check_branch
    %30 = sbr.rel (0) target = $region33
  $region32: #{generator_forward.1} parent=0 // pred_region
    _
  $region33: #{generator_forward.1} parent=0 // pred_fallthru
    _
  // Predicated region
  $region34: #{generator_forward.1} parent=0 // pred_check
    _
  $region35: #{generator_forward.1} parent=0 // pred_check_branch
    %32 = sbr.rel (0) target = $region37
  $region36: #{generator_forward.1} parent=0 // pred_region
    _
  $region37: #{generator_forward.1} parent=0 // pred_fallthru
    _
  // Predicated region
  $region38: #{generator_forward.1} parent=0 // pred_check
    _
  $region39: #{generator_forward.1} parent=0 // pred_check_branch
    %34 = sbr.rel (0) target = $region41
  $region40: #{generator_forward.1} parent=0 // pred_region
    _
  $region41: #{generator_forward.1} parent=0 // pred_fallthru
    _
  %v35 = vld [vmem:[%s0] sm:$0x3]
  %v36 = vld [vmem:[%s1] sm:$0xff]
  %v37 = vld [vmem:[%s1 + $0x8] sm:$0xff]
  %v38 = vld [vmem:[%s1 + $0x10] sm:$0xff]
  %v39 = vld [vmem:[%s1 + $0x18] sm:$0xff]
  %v40 = vld [vmem:[%s1 + $0x20] sm:$0xff]
  %v41 = vld [vmem:[%s1 + $0x28] sm:$0xff]
  %v42 = vld [vmem:[%s1 + $0x30] sm:$0xff]
  %v43 = vld [vmem:[%s1 + $0x38] sm:$0xff]
  %v44 = vld [vmem:[%s1 + $0x40] sm:$0xff]
  %v45 = vld [vmem:[%s1 + $0x48] sm:$0xff]
  %v46 = vld [vmem:[%s1 + $0x50] sm:$0xff]
  %v47 = vld [vmem:[%s1 + $0x58] sm:$0xff]
  %v48 = vld [vmem:[%s1 + $0x60] sm:$0xff]
  %v49 = vld [vmem:[%s1 + $0x68] sm:$0xff]
  %v50 = vld [vmem:[%s1 + $0x70] sm:$0xff]
  %v51 = vld [vmem:[%s1 + $0x78] sm:$0xff]
  %vm52 = vcmask 261120
  %v54 = vsel %vm52, %v35, 0
  %56 = vmatprep.subr.mxu0 0.0
  %57 = vmatpush1.msra.mxu0 0.0
  %58 = vmatprep.subr.mxu0 0.0
  %59 = vmatpush1.msra.mxu0 0.0
  %60 = vmatprep.subr.mxu0 0.0
  %61 = vmatpush1.msra.mxu0 0.0
  %62 = vmatprep.subr.mxu0 0.0
  %63 = vmatpush1.msra.mxu0 0.0
  %64 = vmatprep.subr.mxu0 0.0
  %65 = vmatpush1.msra.mxu0 0.0
  %66 = vmatprep.subr.mxu0 0.0
  %67 = vmatpush1.msra.mxu0 0.0
  %68 = vmatprep.subr.mxu0 0.0
  %69 = vmatpush1.msra.mxu0 0.0
  %70 = vmatprep.subr.mxu0 0.0
  %71 = vmatpush1.msra.mxu0 0.0
  %72 = vmatprep.subr.mxu0 0.0
  %73 = vmatpush1.msra.mxu0 0.0
  %74 = vmatprep.subr.mxu0 0.0
  %75 = vmatpush1.msra.mxu0 0.0
  %76 = vmatprep.subr.mxu0 0.0
  %77 = vmatpush1.msra.mxu0 0.0
  %78 = vmatprep.subr.mxu0 0.0
  %79 = vmatpush1.msra.mxu0 0.0
  %80 = vmatprep.subr.mxu0 %v49
  %81 = vmatpush1.msra.mxu0 %v48
  %82 = vmatprep.subr.mxu0 %v45
  %83 = vmatpush1.msra.mxu0 %v44
  %84 = vmatprep.subr.mxu0 %v41
  %85 = vmatpush1.msra.mxu0 %v40
  %86 = vmatprep.subr.mxu0 %v37
  %87 = vmatpush1.msra.mxu0 %v36
  %88 = vmatprep.subr.mxu0 0.0
  %89 = vmatpush2.msra.mxu0 0.0
  %90 = vmatprep.subr.mxu0 0.0
  %91 = vmatpush2.msra.mxu0 0.0
  %92 = vmatprep.subr.mxu0 0.0
  %93 = vmatpush2.msra.mxu0 0.0
  %94 = vmatprep.subr.mxu0 0.0
  %95 = vmatpush2.msra.mxu0 0.0
  %96 = vmatprep.subr.mxu0 0.0
  %97 = vmatpush2.msra.mxu0 0.0
  %98 = vmatprep.subr.mxu0 0.0
  %99 = vmatpush2.msra.mxu0 0.0
  %100 = vmatprep.subr.mxu0 0.0
  %101 = vmatpush2.msra.mxu0 0.0
  %102 = vmatprep.subr.mxu0 0.0
  %103 = vmatpush2.msra.mxu0 0.0
  %104 = vmatprep.subr.mxu0 0.0
  %105 = vmatpush2.msra.mxu0 0.0
  %106 = vmatprep.subr.mxu0 0.0
  %107 = vmatpush2.msra.mxu0 0.0
  %108 = vmatprep.subr.mxu0 0.0
  %109 = vmatpush2.msra.mxu0 0.0
  %110 = vmatprep.subr.mxu0 0.0
  %111 = vmatpush2.msra.mxu0 0.0
  %112 = vmatprep.subr.mxu0 0.0
  %113 = vmatpush2.msra.mxu0 0.0
  %114 = vmatprep.subr.mxu0 0.0
  %115 = vmatpush2.msra.mxu0 0.0
  %116 = vmatprep.subr.mxu0 0.0
  %117 = vmatpush2.msra.mxu0 0.0
  %118 = vmatprep.subr.mxu0 0.0
  %119 = vmatpush2.msra.mxu0 0.0
  %120 = vmatprep.mubr.f32.mxu0 0.0
  %121 = vmatmul.mubr.f32.gmra.mxu0 %v54
  %v122 = vpop.f32.mrf.mxu0
  %v123 = vadd.f32 0.0, %v122
  %v124 = vpop.f32.mrf.mxu0
  %v125 = vadd.f32 0.0, %v124
  %126 = vdwg.mxu0
  %127 = vmatprep.subr.mxu0 0.0
  %128 = vmatpush1.msra.mxu0 0.0
  %129 = vmatprep.subr.mxu0 0.0
  %130 = vmatpush1.msra.mxu0 0.0
  %131 = vmatprep.subr.mxu0 0.0
  %132 = vmatpush1.msra.mxu0 0.0
  %133 = vmatprep.subr.mxu0 0.0
  %134 = vmatpush1.msra.mxu0 0.0
  %135 = vmatprep.subr.mxu0 0.0
  %136 = vmatpush1.msra.mxu0 0.0
  %137 = vmatprep.subr.mxu0 0.0
  %138 = vmatpush1.msra.mxu0 0.0
  %139 = vmatprep.subr.mxu0 0.0
  %140 = vmatpush1.msra.mxu0 0.0
  %141 = vmatprep.subr.mxu0 0.0
  %142 = vmatpush1.msra.mxu0 0.0
  %143 = vmatprep.subr.mxu0 0.0
  %144 = vmatpush1.msra.mxu0 0.0
  %145 = vmatprep.subr.mxu0 0.0
  %146 = vmatpush1.msra.mxu0 0.0
  %147 = vmatprep.subr.mxu0 0.0
  %148 = vmatpush1.msra.mxu0 0.0
  %149 = vmatprep.subr.mxu0 0.0
  %150 = vmatpush1.msra.mxu0 0.0
  %151 = vmatprep.subr.mxu0 %v51
  %152 = vmatpush1.msra.mxu0 %v50
  %153 = vmatprep.subr.mxu0 %v47
  %154 = vmatpush1.msra.mxu0 %v46
  %155 = vmatprep.subr.mxu0 %v43
  %156 = vmatpush1.msra.mxu0 %v42
  %157 = vmatprep.subr.mxu0 %v39
  %158 = vmatpush1.msra.mxu0 %v38
  %159 = vmatprep.subr.mxu0 0.0
  %160 = vmatpush2.msra.mxu0 0.0
  %161 = vmatprep.subr.mxu0 0.0
  %162 = vmatpush2.msra.mxu0 0.0
  %163 = vmatprep.subr.mxu0 0.0
  %164 = vmatpush2.msra.mxu0 0.0
  %165 = vmatprep.subr.mxu0 0.0
  %166 = vmatpush2.msra.mxu0 0.0
  %167 = vmatprep.subr.mxu0 0.0
  %168 = vmatpush2.msra.mxu0 0.0
  %169 = vmatprep.subr.mxu0 0.0
  %170 = vmatpush2.msra.mxu0 0.0
  %171 = vmatprep.subr.mxu0 0.0
  %172 = vmatpush2.msra.mxu0 0.0
  %173 = vmatprep.subr.mxu0 0.0
  %174 = vmatpush2.msra.mxu0 0.0
  %175 = vmatprep.subr.mxu0 0.0
  %176 = vmatpush2.msra.mxu0 0.0
  %177 = vmatprep.subr.mxu0 0.0
  %178 = vmatpush2.msra.mxu0 0.0
  %179 = vmatprep.subr.mxu0 0.0
  %180 = vmatpush2.msra.mxu0 0.0
  %181 = vmatprep.subr.mxu0 0.0
  %182 = vmatpush2.msra.mxu0 0.0
  %183 = vmatprep.subr.mxu0 0.0
  %184 = vmatpush2.msra.mxu0 0.0
  %185 = vmatprep.subr.mxu0 0.0
  %186 = vmatpush2.msra.mxu0 0.0
  %187 = vmatprep.subr.mxu0 0.0
  %188 = vmatpush2.msra.mxu0 0.0
  %189 = vmatprep.subr.mxu0 0.0
  %190 = vmatpush2.msra.mxu0 0.0
  %191 = vmatprep.mubr.f32.mxu0 0.0
  %192 = vmatmul.mubr.f32.gmra.mxu0 %v54
  %v193 = vpop.f32.mrf.mxu0
  %v194 = vadd.f32 0.0, %v193
  %v195 = vpop.f32.mrf.mxu0
  %v196 = vadd.f32 0.0, %v195
  %197 = vdwg.mxu0
  %198 = vst [vmem:[#allocation2] sm:$0x1] %v123
  %199 = vst [vmem:[#allocation2 + $0x1] sm:$0x1] %v125
  %200 = vst [vmem:[#allocation2 + $0x2] sm:$0x1] %v194
  %201 = vst [vmem:[#allocation2 + $0x3] sm:$0x1] %v196
  %202 = vst [vmem:[#allocation2 + $0x3] sm:$0x2] %v123
  %203 = vst [vmem:[#allocation2 + $0x4] sm:$0x2] %v125
  %204 = vst [vmem:[#allocation2 + $0x5] sm:$0x2] %v194
  %205 = vst [vmem:[#allocation2 + $0x6] sm:$0x2] %v196
  %v206 = vld [vmem:[#allocation2] sm:$0xff]
  %v207 = vld [vmem:[%s2] sm:$0x1]
  %v209 = vlaneseq
  %v210 = vshrl.u32 %v209, 7
  %v211 = vsub.s32 0, %v210
  %v212 = vrot.slane %v207, %v211
  %v214 = vadd.f32 %v206, %v212
  %v215 = vrot.slane %v214, 4
  %v216 = vadd.f32 %v214, %v215
  %v217 = vrot.slane %v216, 2
  %v218 = vadd.f32 %v216, %v217
  %v219 = vrot.slane %v218, 1
  %v220 = vadd.f32 %v218, %v219
  %v221 = vmul.f32 %v214, %v214
  %v222 = vrot.slane %v221, 4
  %v223 = vadd.f32 %v221, %v222
  %v224 = vrot.slane %v223, 2
  %v225 = vadd.f32 %v223, %v224
  %v226 = vrot.slane %v225, 1
  %v227 = vadd.f32 %v225, %v226
  %229 = vrot.lane.b32.xlu0 %v220, 96
  %v230 = vpop.permute.xlu0 %229
  %v232 = vadd.f32 %v220, %v230
  %234 = vrot.lane.b32.xlu0 %v227, 96
  %v235 = vpop.permute.xlu0 %234
  %v237 = vadd.f32 %v227, %v235
  %238 = vrot.lane.b32.xlu0 %v220, 64
  %v239 = vpop.permute.xlu0 %238
  %v241 = vadd.f32 %v232, %v239
  %242 = vrot.lane.b32.xlu0 %v227, 64
  %v243 = vpop.permute.xlu0 %242
  %v245 = vadd.f32 %v237, %v243
  %246 = vrot.lane.b32.xlu0 %v220, 32
  %v247 = vpop.permute.xlu0 %246
  %v249 = vadd.f32 %v241, %v247
  %250 = vrot.lane.b32.xlu0 %v227, 32
  %v251 = vpop.permute.xlu0 %250
  %v253 = vadd.f32 %v245, %v251
  %v254 = vmul.f32 %v249, 0.03125
  %v255 = vmul.f32 %v253, 0.03125
  %v256 = vmul.f32 %v254, %v254
  %v257 = vsub.f32 %v255, %v256
  %v258 = vadd.f32 %v257, 1e-05
  %v259 = vrsqrt.pop %v258
  %261 = vrot.lane.b32.xlu0 %v254, 32
  %v262 = vpop.permute.xlu0 %261
  %264 = vrot.lane.b32.xlu0 %v254, 64
  %v265 = vpop.permute.xlu0 %264
  %267 = vrot.lane.b32.xlu0 %v254, 96
  %v268 = vpop.permute.xlu0 %267
  %v270 = vsel %vm52, %v254, %v262
  %vm271 = vcmask 523264
  %v272 = vsel %vm271, %v270, %v265
  %vm273 = vcmask 785408
  %v274 = vsel %vm273, %v272, %v268
  %276 = vrot.lane.b32.xlu0 %v259, 32
  %v277 = vpop.permute.xlu0 %276
  %279 = vrot.lane.b32.xlu0 %v259, 64
  %v280 = vpop.permute.xlu0 %279
  %282 = vrot.lane.b32.xlu0 %v259, 96
  %v283 = vpop.permute.xlu0 %282
  %v285 = vsel %vm52, %v259, %v277
  %v286 = vsel %vm271, %v285, %v280
  %v287 = vsel %vm273, %v286, %v283
  %v288 = vlaneseq
  %v289 = vshrl.u32 %v288, 7
  %v290 = vsub.s32 0, %v289
  %v291 = vrot.slane %v274, %v290
  %v292 = vsub.f32 %v214, %v291
  %v293 = vlaneseq
  %v294 = vshrl.u32 %v293, 7
  %v295 = vsub.s32 0, %v294
  %v296 = vrot.slane %v287, %v295
  %v297 = vmul.f32 %v292, %v296
  %v298 = vld [vmem:[%s3] sm:$0x1]
  %v300 = vlaneseq
  %v301 = vshrl.u32 %v300, 7
  %v302 = vsub.s32 0, %v301
  %v303 = vrot.slane %v298, %v302
  %v305 = vmul.f32 %v297, %v303
  %v306 = vld [vmem:[%s4] sm:$0x1]
  %v308 = vlaneseq
  %v309 = vshrl.u32 %v308, 7
  %v310 = vsub.s32 0, %v309
  %v311 = vrot.slane %v306, %v310
  %v313 = vadd.f32 %v305, %v311
  %vm314 = vcmp.ge.f32.partialorder %v313, 0.0
  %v315 = vmul.f32 %v313, 0.2
  %v316 = vsel %vm314, %v313, %v315
  %v318 = vrot.slane %v316, 7
  %vm320 = vcmask 1040384
  %v321 = vsel %vm320, 0.0, %v318
  %v322 = vlaneseq
  %v323 = vshrl.u32 %v322, 7
  %v324 = vand.u32 %v323, 3
  %v325 = vadd.s32 %v324, 4294967295
  %vm326 = vcmp.ge.s32.totalorder %v325, 0
  %vm327 = vcmp.lt.s32.totalorder %v325, 4
  %vm328 = vmand %vm326, %vm327
  %v329 = vsel %vm328, %v321, 0.0
  %v330 = vrot.slane %v316, 1
  %vm332 = vcmask 1046528
  %v333 = vsel %vm332, %v330, 0.0
  %v334 = vadd.s32 %v324, 1
  %vm335 = vcmp.ge.s32.totalorder %v334, 0
  %vm336 = vcmp.lt.s32.totalorder %v334, 4
  %vm337 = vmand %vm335, %vm336
  %v338 = vsel %vm337, %v333, 0.0
  %v339 = vld [vmem:[%s5] sm:$0xff]
  %v340 = vld [vmem:[%s5 + $0x8] sm:$0xff]
  %v341 = vld [vmem:[%s5 + $0x10] sm:$0xff]
  %v342 = vld [vmem:[%s5 + $0x18] sm:$0xff]
  %v343 = vld [vmem:[%s5 + $0x20] sm:$0xff]
  %v344 = vld [vmem:[%s5 + $0x28] sm:$0xff]
  %v345 = vld [vmem:[%s5 + $0x30] sm:$0xff]
  %v346 = vld [vmem:[%s5 + $0x38] sm:$0xff]
  %v347 = vld [vmem:[%s5 + $0x40] sm:$0xff]
  %v348 = vld [vmem:[%s5 + $0x48] sm:$0xff]
  %v349 = vld [vmem:[%s5 + $0x50] sm:$0xff]
  %v350 = vld [vmem:[%s5 + $0x58] sm:$0xff]
  %v351 = vld [vmem:[%s5 + $0x60] sm:$0xff]
  %v352 = vld [vmem:[%s5 + $0x68] sm:$0xff]
  %v353 = vld [vmem:[%s5 + $0x70] sm:$0xff]
  %v354 = vld [vmem:[%s5 + $0x78] sm:$0xff]
  %v355 = vld [vmem:[%s5 + $0x80] sm:$0xff]
  %v356 = vld [vmem:[%s5 + $0x88] sm:$0xff]
  %v357 = vld [vmem:[%s5 + $0x90] sm:$0xff]
  %v358 = vld [vmem:[%s5 + $0x98] sm:$0xff]
  %v359 = vld [vmem:[%s5 + $0xa0] sm:$0xff]
  %v360 = vld [vmem:[%s5 + $0xa8] sm:$0xff]
  %v361 = vld [vmem:[%s5 + $0xb0] sm:$0xff]
  %v362 = vld [vmem:[%s5 + $0xb8] sm:$0xff]
  %v363 = vld [vmem:[%s5 + $0xc0] sm:$0xff]
  %v364 = vld [vmem:[%s5 + $0xc8] sm:$0xff]
  %v365 = vld [vmem:[%s5 + $0xd0] sm:$0xff]
  %v366 = vld [vmem:[%s5 + $0xd8] sm:$0xff]
  %v367 = vld [vmem:[%s5 + $0xe0] sm:$0xff]
  %v368 = vld [vmem:[%s5 + $0xe8] sm:$0xff]
  %v369 = vld [vmem:[%s5 + $0xf0] sm:$0xff]
  %v370 = vld [vmem:[%s5 + $0xf8] sm:$0xff]
  %v371 = vld [vmem:[%s5 + $0x100] sm:$0xff]
  %v372 = vld [vmem:[%s5 + $0x108] sm:$0xff]
  %v373 = vld [vmem:[%s5 + $0x110] sm:$0xff]
  %v374 = vld [vmem:[%s5 + $0x118] sm:$0xff]
  %v375 = vld [vmem:[%s5 + $0x120] sm:$0xff]
  %v376 = vld [vmem:[%s5 + $0x128] sm:$0xff]
  %v377 = vld [vmem:[%s5 + $0x130] sm:$0xff]
  %v378 = vld [vmem:[%s5 + $0x138] sm:$0xff]
  %v379 = vld [vmem:[%s5 + $0x140] sm:$0xff]
  %v380 = vld [vmem:[%s5 + $0x148] sm:$0xff]
  %v381 = vld [vmem:[%s5 + $0x150] sm:$0xff]
  %v382 = vld [vmem:[%s5 + $0x158] sm:$0xff]
  %v383 = vld [vmem:[%s5 + $0x160] sm:$0xff]
  %v384 = vld [vmem:[%s5 + $0x168] sm:$0xff]
  %v385 = vld [vmem:[%s5 + $0x170] sm:$0xff]
  %v386 = vld [vmem:[%s5 + $0x178] sm:$0xff]
  %v387 = vld [vmem:[%s5 + $0x180] sm:$0xff]
  %v388 = vld [vmem:[%s5 + $0x188] sm:$0xff]
  %v389 = vld [vmem:[%s5 + $0x190] sm:$0xff]
  %v390 = vld [vmem:[%s5 + $0x198] sm:$0xff]
  %v391 = vld [vmem:[%s5 + $0x1a0] sm:$0xff]
  %v392 = vld [vmem:[%s5 + $0x1a8] sm:$0xff]
  %v393 = vld [vmem:[%s5 + $0x1b0] sm:$0xff]
  %v394 = vld [vmem:[%s5 + $0x1b8] sm:$0xff]
  %v395 = vld [vmem:[%s5 + $0x1c0] sm:$0xff]
  %v396 = vld [vmem:[%s5 + $0x1c8] sm:$0xff]
  %v397 = vld [vmem:[%s5 + $0x1d0] sm:$0xff]
  %v398 = vld [vmem:[%s5 + $0x1d8] sm:$0xff]
  %v399 = vld [vmem:[%s5 + $0x1e0] sm:$0xff]
  %v400 = vld [vmem:[%s5 + $0x1e8] sm:$0xff]
  %v401 = vld [vmem:[%s5 + $0x1f0] sm:$0xff]
  %v402 = vld [vmem:[%s5 + $0x1f8] sm:$0xff]
  %v403 = vld [vmem:[%s5 + $0x200] sm:$0xff]
  %v404 = vld [vmem:[%s5 + $0x208] sm:$0xff]
  %v405 = vld [vmem:[%s5 + $0x210] sm:$0xff]
  %v406 = vld [vmem:[%s5 + $0x218] sm:$0xff]
  %v407 = vld [vmem:[%s5 + $0x220] sm:$0xff]
  %v408 = vld [vmem:[%s5 + $0x228] sm:$0xff]
  %v409 = vld [vmem:[%s5 + $0x230] sm:$0xff]
  %v410 = vld [vmem:[%s5 + $0x238] sm:$0xff]
  %v411 = vld [vmem:[%s5 + $0x240] sm:$0xff]
  %v412 = vld [vmem:[%s5 + $0x248] sm:$0xff]
  %v413 = vld [vmem:[%s5 + $0x250] sm:$0xff]
  %v414 = vld [vmem:[%s5 + $0x258] sm:$0xff]
  %v415 = vld [vmem:[%s5 + $0x260] sm:$0xff]
  %v416 = vld [vmem:[%s5 + $0x268] sm:$0xff]
  %v417 = vld [vmem:[%s5 + $0x270] sm:$0xff]
  %v418 = vld [vmem:[%s5 + $0x278] sm:$0xff]
  %v419 = vld [vmem:[%s5 + $0x280] sm:$0xff]
  %v420 = vld [vmem:[%s5 + $0x288] sm:$0xff]
  %v421 = vld [vmem:[%s5 + $0x290] sm:$0xff]
  %v422 = vld [vmem:[%s5 + $0x298] sm:$0xff]
  %v423 = vld [vmem:[%s5 + $0x2a0] sm:$0xff]
  %v424 = vld [vmem:[%s5 + $0x2a8] sm:$0xff]
  %v425 = vld [vmem:[%s5 + $0x2b0] sm:$0xff]
  %v426 = vld [vmem:[%s5 + $0x2b8] sm:$0xff]
  %v427 = vld [vmem:[%s5 + $0x2c0] sm:$0xff]
  %v428 = vld [vmem:[%s5 + $0x2c8] sm:$0xff]
  %v429 = vld [vmem:[%s5 + $0x2d0] sm:$0xff]
  %v430 = vld [vmem:[%s5 + $0x2d8] sm:$0xff]
  %v431 = vld [vmem:[%s5 + $0x2e0] sm:$0xff]
  %v432 = vld [vmem:[%s5 + $0x2e8] sm:$0xff]
  %v433 = vld [vmem:[%s5 + $0x2f0] sm:$0xff]
  %v434 = vld [vmem:[%s5 + $0x2f8] sm:$0xff]
  %435 = vmatprep.subr.mxu0 %v370
  %436 = vmatpush1.msra.mxu0 %v369
  %437 = vmatprep.subr.mxu0 %v368
  %438 = vmatpush1.msra.mxu0 %v367
  %439 = vmatprep.subr.mxu0 %v366
  %440 = vmatpush1.msra.mxu0 %v365
  %441 = vmatprep.subr.mxu0 %v364
  %442 = vmatpush1.msra.mxu0 %v363
  %443 = vmatprep.subr.mxu0 %v362
  %444 = vmatpush1.msra.mxu0 %v361
  %445 = vmatprep.subr.mxu0 %v360
  %446 = vmatpush1.msra.mxu0 %v359
  %447 = vmatprep.subr.mxu0 %v358
  %448 = vmatpush1.msra.mxu0 %v357
  %449 = vmatprep.subr.mxu0 %v356
  %450 = vmatpush1.msra.mxu0 %v355
  %451 = vmatprep.subr.mxu0 %v354
  %452 = vmatpush1.msra.mxu0 %v353
  %453 = vmatprep.subr.mxu0 %v352
  %454 = vmatpush1.msra.mxu0 %v351
  %455 = vmatprep.subr.mxu0 %v350
  %456 = vmatpush1.msra.mxu0 %v349
  %457 = vmatprep.subr.mxu0 %v348
  %458 = vmatpush1.msra.mxu0 %v347
  %459 = vmatprep.subr.mxu0 %v346
  %460 = vmatpush1.msra.mxu0 %v345
  %461 = vmatprep.subr.mxu0 %v344
  %462 = vmatpush1.msra.mxu0 %v343
  %463 = vmatprep.subr.mxu0 %v342
  %464 = vmatpush1.msra.mxu0 %v341
  %465 = vmatprep.subr.mxu0 %v340
  %466 = vmatpush1.msra.mxu0 %v339
  %467 = vmatprep.subr.mxu0 %v402
  %468 = vmatpush2.msra.mxu0 %v401
  %469 = vmatprep.subr.mxu0 %v400
  %470 = vmatpush2.msra.mxu0 %v399
  %471 = vmatprep.subr.mxu0 %v398
  %472 = vmatpush2.msra.mxu0 %v397
  %473 = vmatprep.subr.mxu0 %v396
  %474 = vmatpush2.msra.mxu0 %v395
  %475 = vmatprep.subr.mxu0 %v394
  %476 = vmatpush2.msra.mxu0 %v393
  %477 = vmatprep.subr.mxu0 %v392
  %478 = vmatpush2.msra.mxu0 %v391
  %479 = vmatprep.subr.mxu0 %v390
  %480 = vmatpush2.msra.mxu0 %v389
  %481 = vmatprep.subr.mxu0 %v388
  %482 = vmatpush2.msra.mxu0 %v387
  %483 = vmatprep.subr.mxu0 %v386
  %484 = vmatpush2.msra.mxu0 %v385
  %485 = vmatprep.subr.mxu0 %v384
  %486 = vmatpush2.msra.mxu0 %v383
  %487 = vmatprep.subr.mxu0 %v382
  %488 = vmatpush2.msra.mxu0 %v381
  %489 = vmatprep.subr.mxu0 %v380
  %490 = vmatpush2.msra.mxu0 %v379
  %491 = vmatprep.subr.mxu0 %v378
  %492 = vmatpush2.msra.mxu0 %v377
  %493 = vmatprep.subr.mxu0 %v376
  %494 = vmatpush2.msra.mxu0 %v375
  %495 = vmatprep.subr.mxu0 %v374
  %496 = vmatpush2.msra.mxu0 %v373
  %497 = vmatprep.subr.mxu0 %v372
  %498 = vmatpush2.msra.mxu0 %v371
  %499 = vmatprep.mubr.f32.mxu0 %v316
  %500 = vmatmul.mubr.f32.gmra.mxu0 %v329
  %v501 = vpop.f32.mrf.mxu0
  %v502 = vadd.f32 0.0, %v501
  %v503 = vpop.f32.mrf.mxu0
  %v504 = vadd.f32 0.0, %v503
  %505 = vdwg.mxu0
  %506 = vmatprep.subr.mxu0 %v434
  %507 = vmatpush1.msra.mxu0 %v433
  %508 = vmatprep.subr.mxu0 %v432
  %509 = vmatpush1.msra.mxu0 %v431
  %510 = vmatprep.subr.mxu0 %v430
  %511 = vmatpush1.msra.mxu0 %v429
  %512 = vmatprep.subr.mxu0 %v428
  %513 = vmatpush1.msra.mxu0 %v427
  %514 = vmatprep.subr.mxu0 %v426
  %515 = vmatpush1.msra.mxu0 %v425
  %516 = vmatprep.subr.mxu0 %v424
  %517 = vmatpush1.msra.mxu0 %v423
  %518 = vmatprep.subr.mxu0 %v422
  %519 = vmatpush1.msra.mxu0 %v421
  %520 = vmatprep.subr.mxu0 %v420
  %521 = vmatpush1.msra.mxu0 %v419
  %522 = vmatprep.subr.mxu0 %v418
  %523 = vmatpush1.msra.mxu0 %v417
  %524 = vmatprep.subr.mxu0 %v416
  %525 = vmatpush1.msra.mxu0 %v415
  %526 = vmatprep.subr.mxu0 %v414
  %527 = vmatpush1.msra.mxu0 %v413
  %528 = vmatprep.subr.mxu0 %v412
  %529 = vmatpush1.msra.mxu0 %v411
  %530 = vmatprep.subr.mxu0 %v410
  %531 = vmatpush1.msra.mxu0 %v409
  %532 = vmatprep.subr.mxu0 %v408
  %533 = vmatpush1.msra.mxu0 %v407
  %534 = vmatprep.subr.mxu0 %v406
  %535 = vmatpush1.msra.mxu0 %v405
  %536 = vmatprep.subr.mxu0 %v404
  %537 = vmatpush1.msra.mxu0 %v403
  %538 = vmatprep.subr.mxu0 0.0
  %539 = vmatpush2.msra.mxu0 0.0
  %540 = vmatprep.subr.mxu0 0.0
  %541 = vmatpush2.msra.mxu0 0.0
  %542 = vmatprep.subr.mxu0 0.0
  %543 = vmatpush2.msra.mxu0 0.0
  %544 = vmatprep.subr.mxu0 0.0
  %545 = vmatpush2.msra.mxu0 0.0
  %546 = vmatprep.subr.mxu0 0.0
  %547 = vmatpush2.msra.mxu0 0.0
  %548 = vmatprep.subr.mxu0 0.0
  %549 = vmatpush2.msra.mxu0 0.0
  %550 = vmatprep.subr.mxu0 0.0
  %551 = vmatpush2.msra.mxu0 0.0
  %552 = vmatprep.subr.mxu0 0.0
  %553 = vmatpush2.msra.mxu0 0.0
  %554 = vmatprep.subr.mxu0 0.0
  %555 = vmatpush2.msra.mxu0 0.0
  %556 = vmatprep.subr.mxu0 0.0
  %557 = vmatpush2.msra.mxu0 0.0
  %558 = vmatprep.subr.mxu0 0.0
  %559 = vmatpush2.msra.mxu0 0.0
  %560 = vmatprep.subr.mxu0 0.0
  %561 = vmatpush2.msra.mxu0 0.0
  %562 = vmatprep.subr.mxu0 0.0
  %563 = vmatpush2.msra.mxu0 0.0
  %564 = vmatprep.subr.mxu0 0.0
  %565 = vmatpush2.msra.mxu0 0.0
  %566 = vmatprep.subr.mxu0 0.0
  %567 = vmatpush2.msra.mxu0 0.0
  %568 = vmatprep.subr.mxu0 0.0
  %569 = vmatpush2.msra.mxu0 0.0
  %570 = vmatprep.mubr.f32.mxu0 0.0
  %571 = vmatmul.mubr.f32.gmra.mxu0 %v338
  %v572 = vpop.f32.mrf.mxu0
  %v573 = vadd.f32 %v502, %v572
  %v574 = vpop.f32.mrf.mxu0
  %v575 = vadd.f32 %v504, %v574
  %576 = vdwg.mxu0
  %v577 = vrot.slane %v573, 4
  %v578 = vadd.f32 %v573, %v577
  %v579 = vrot.slane %v578, 2
  %v580 = vadd.f32 %v578, %v579
  %v581 = vrot.slane %v580, 1
  %v582 = vadd.f32 %v580, %v581
  %v583 = vrot.slane %v575, 4
  %v584 = vadd.f32 %v575, %v583
  %v585 = vrot.slane %v584, 2
  %v586 = vadd.f32 %v584, %v585
  %v587 = vrot.slane %v586, 1
  %v588 = vadd.f32 %v586, %v587
  %v589 = vmul.f32 %v573, %v573
  %v590 = vmul.f32 %v575, %v575
  %v591 = vrot.slane %v589, 4
  %v592 = vadd.f32 %v589, %v591
  %v593 = vrot.slane %v592, 2
  %v594 = vadd.f32 %v592, %v593
  %v595 = vrot.slane %v594, 1
  %v596 = vadd.f32 %v594, %v595
  %v597 = vrot.slane %v590, 4
  %v598 = vadd.f32 %v590, %v597
  %v599 = vrot.slane %v598, 2
  %v600 = vadd.f32 %v598, %v599
  %v601 = vrot.slane %v600, 1
  %v602 = vadd.f32 %v600, %v601
  %604 = vrot.lane.b32.xlu0 %v582, 112
  %v605 = vpop.permute.xlu0 %604
  %v607 = vadd.f32 %v582, %v605
  %609 = vrot.lane.b32.xlu0 %v596, 112
  %v610 = vpop.permute.xlu0 %609
  %v612 = vadd.f32 %v596, %v610
  %613 = vrot.lane.b32.xlu0 %v582, 96
  %v614 = vpop.permute.xlu0 %613
  %v616 = vadd.f32 %v607, %v614
  %617 = vrot.lane.b32.xlu0 %v596, 96
  %v618 = vpop.permute.xlu0 %617
  %v620 = vadd.f32 %v612, %v618
  %621 = vrot.lane.b32.xlu0 %v582, 80
  %v622 = vpop.permute.xlu0 %621
  %v624 = vadd.f32 %v616, %v622
  %625 = vrot.lane.b32.xlu0 %v596, 80
  %v626 = vpop.permute.xlu0 %625
  %v628 = vadd.f32 %v620, %v626
  %629 = vrot.lane.b32.xlu0 %v582, 64
  %v630 = vpop.permute.xlu0 %629
  %v632 = vadd.f32 %v624, %v630
  %633 = vrot.lane.b32.xlu0 %v596, 64
  %v634 = vpop.permute.xlu0 %633
  %v636 = vadd.f32 %v628, %v634
  %637 = vrot.lane.b32.xlu0 %v582, 48
  %v638 = vpop.permute.xlu0 %637
  %v640 = vadd.f32 %v632, %v638
  %641 = vrot.lane.b32.xlu0 %v596, 48
  %v642 = vpop.permute.xlu0 %641
  %v644 = vadd.f32 %v636, %v642
  %645 = vrot.lane.b32.xlu0 %v582, 32
  %v646 = vpop.permute.xlu0 %645
  %v648 = vadd.f32 %v640, %v646
  %649 = vrot.lane.b32.xlu0 %v596, 32
  %v650 = vpop.permute.xlu0 %649
  %v652 = vadd.f32 %v644, %v650
  %653 = vrot.lane.b32.xlu0 %v582, 16
  %v654 = vpop.permute.xlu0 %653
  %v656 = vadd.f32 %v648, %v654
  %657 = vrot.lane.b32.xlu0 %v596, 16
  %v658 = vpop.permute.xlu0 %657
  %v660 = vadd.f32 %v652, %v658
  %v661 = vadd.f32 %v656, %v588
  %v662 = vadd.f32 %v660, %v602
  %664 = vrot.lane.b32.xlu0 %v588, 112
  %v665 = vpop.permute.xlu0 %664
  %v667 = vadd.f32 %v661, %v665
  %669 = vrot.lane.b32.xlu0 %v602, 112
  %v670 = vpop.permute.xlu0 %669
  %v672 = vadd.f32 %v662, %v670
  %673 = vrot.lane.b32.xlu0 %v588, 96
  %v674 = vpop.permute.xlu0 %673
  %v676 = vadd.f32 %v667, %v674
  %677 = vrot.lane.b32.xlu0 %v602, 96
  %v678 = vpop.permute.xlu0 %677
  %v680 = vadd.f32 %v672, %v678
  %681 = vrot.lane.b32.xlu0 %v588, 80
  %v682 = vpop.permute.xlu0 %681
  %v684 = vadd.f32 %v676, %v682
  %685 = vrot.lane.b32.xlu0 %v602, 80
  %v686 = vpop.permute.xlu0 %685
  %v688 = vadd.f32 %v680, %v686
  %689 = vrot.lane.b32.xlu0 %v588, 64
  %v690 = vpop.permute.xlu0 %689
  %v692 = vadd.f32 %v684, %v690
  %693 = vrot.lane.b32.xlu0 %v602, 64
  %v694 = vpop.permute.xlu0 %693
  %v696 = vadd.f32 %v688, %v694
  %697 = vrot.lane.b32.xlu0 %v588, 48
  %v698 = vpop.permute.xlu0 %697
  %v700 = vadd.f32 %v692, %v698
  %701 = vrot.lane.b32.xlu0 %v602, 48
  %v702 = vpop.permute.xlu0 %701
  %v704 = vadd.f32 %v696, %v702
  %705 = vrot.lane.b32.xlu0 %v588, 32
  %v706 = vpop.permute.xlu0 %705
  %v708 = vadd.f32 %v700, %v706
  %709 = vrot.lane.b32.xlu0 %v602, 32
  %v710 = vpop.permute.xlu0 %709
  %v712 = vadd.f32 %v704, %v710
  %713 = vrot.lane.b32.xlu0 %v588, 16
  %v714 = vpop.permute.xlu0 %713
  %v716 = vadd.f32 %v708, %v714
  %717 = vrot.lane.b32.xlu0 %v602, 16
  %v718 = vpop.permute.xlu0 %717
  %v720 = vadd.f32 %v712, %v718
  %v721 = vmul.f32 %v716, 0.0078125
  %v722 = vmul.f32 %v720, 0.0078125
  %v723 = vmul.f32 %v721, %v721
  %v724 = vsub.f32 %v722, %v723
  %v725 = vadd.f32 %v724, 1e-05
  %v726 = vrsqrt.pop %v725
  %728 = vrot.lane.b32.xlu0 %v721, 16
  %v729 = vpop.permute.xlu0 %728
  %731 = vrot.lane.b32.xlu0 %v721, 32
  %v732 = vpop.permute.xlu0 %731
  %734 = vrot.lane.b32.xlu0 %v721, 48
  %v735 = vpop.permute.xlu0 %734
  %737 = vrot.lane.b32.xlu0 %v721, 64
  %v738 = vpop.permute.xlu0 %737
  %740 = vrot.lane.b32.xlu0 %v721, 80
  %v741 = vpop.permute.xlu0 %740
  %743 = vrot.lane.b32.xlu0 %v721, 96
  %v744 = vpop.permute.xlu0 %743
  %746 = vrot.lane.b32.xlu0 %v721, 112
  %v747 = vpop.permute.xlu0 %746
  %vm749 = vcmask 130048
  %v750 = vsel %vm749, %v721, %v729
  %v751 = vsel %vm52, %v750, %v732
  %vm752 = vcmask 392192
  %v753 = vsel %vm752, %v751, %v735
  %v754 = vsel %vm271, %v753, %v738
  %vm755 = vcmask 654336
  %v756 = vsel %vm755, %v754, %v741
  %v757 = vsel %vm273, %v756, %v744
  %vm758 = vcmask 916480
  %v759 = vsel %vm758, %v757, %v747
  %761 = vrot.lane.b32.xlu0 %v726, 16
  %v762 = vpop.permute.xlu0 %761
  %764 = vrot.lane.b32.xlu0 %v726, 32
  %v765 = vpop.permute.xlu0 %764
  %767 = vrot.lane.b32.xlu0 %v726, 48
  %v768 = vpop.permute.xlu0 %767
  %770 = vrot.lane.b32.xlu0 %v726, 64
  %v771 = vpop.permute.xlu0 %770
  %773 = vrot.lane.b32.xlu0 %v726, 80
  %v774 = vpop.permute.xlu0 %773
  %776 = vrot.lane.b32.xlu0 %v726, 96
  %v777 = vpop.permute.xlu0 %776
  %779 = vrot.lane.b32.xlu0 %v726, 112
  %v780 = vpop.permute.xlu0 %779
  %v782 = vsel %vm749, %v726, %v762
  %v783 = vsel %vm52, %v782, %v765
  %v784 = vsel %vm752, %v783, %v768
  %v785 = vsel %vm271, %v784, %v771
  %v786 = vsel %vm755, %v785, %v774
  %v787 = vsel %vm273, %v786, %v777
  %v788 = vsel %vm758, %v787, %v780
  %v789 = vlaneseq
  %v790 = vshrl.u32 %v789, 7
  %v791 = vsub.s32 0, %v790
  %v792 = vrot.slane %v759, %v791
  %v793 = vsub.f32 %v573, %v792
  %v794 = vsub.f32 %v575, %v792
  %v795 = vlaneseq
  %v796 = vshrl.u32 %v795, 7
  %v797 = vsub.s32 0, %v796
  %v798 = vrot.slane %v788, %v797
  %v799 = vmul.f32 %v793, %v798
  %v800 = vmul.f32 %v794, %v798
  %v801 = vld [vmem:[%s6] sm:$0x3]
  %v803 = vlaneseq
  %v804 = vshrl.u32 %v803, 7
  %v805 = vsub.s32 0, %v804
  %v806 = vrot.slane %v801, %v805
  %v807 = vlaneseq
  %v808 = vshrl.u32 %v807, 7
  %v809 = vsub.s32 1, %v808
  %v810 = vrot.slane %v801, %v809
  %v813 = vmul.f32 %v799, %v806
  %v814 = vmul.f32 %v800, %v810
  %v815 = vld [vmem:[%s7] sm:$0x3]
  %v817 = vlaneseq
  %v818 = vshrl.u32 %v817, 7
  %v819 = vsub.s32 0, %v818
  %v820 = vrot.slane %v815, %v819
  %v821 = vlaneseq
  %v822 = vshrl.u32 %v821, 7
  %v823 = vsub.s32 1, %v822
  %v824 = vrot.slane %v815, %v823
  %v827 = vadd.f32 %v813, %v820
  %v828 = vadd.f32 %v814, %v824
  %vm829 = vcmp.ge.f32.partialorder %v827, 0.0
  %vm830 = vcmp.ge.f32.partialorder %v828, 0.0
  %v831 = vmul.f32 %v827, 0.2
  %v832 = vmul.f32 %v828, 0.2
  %v833 = vsel %vm829, %v827, %v831
  %v834 = vsel %vm830, %v828, %v832
  %v836 = vrot.slane %v834, 7
  %v838 = vsel %vm320, 0.0, %v836
  %v839 = vsel %vm328, %v838, 0.0
  %v841 = vrot.slane %v833, 1
  %v843 = vsel %vm332, %v841, 0.0
  %v844 = vsel %vm337, %v843, 0.0
  %v845 = vld [vmem:[%s8] sm:$0xff]
  %v846 = vld [vmem:[%s8 + $0x8] sm:$0xff]
  %v847 = vld [vmem:[%s8 + $0x10] sm:$0xff]
  %v848 = vld [vmem:[%s8 + $0x18] sm:$0xff]
  %v849 = vld [vmem:[%s8 + $0x20] sm:$0xff]
  %v850 = vld [vmem:[%s8 + $0x28] sm:$0xff]
  %v851 = vld [vmem:[%s8 + $0x30] sm:$0xff]
  %v852 = vld [vmem:[%s8 + $0x38] sm:$0xff]
  %v853 = vld [vmem:[%s8 + $0x40] sm:$0xff]
  %v854 = vld [vmem:[%s8 + $0x48] sm:$0xff]
  %v855 = vld [vmem:[%s8 + $0x50] sm:$0xff]
  %v856 = vld [vmem:[%s8 + $0x58] sm:$0xff]
  %v857 = vld [vmem:[%s8 + $0x60] sm:$0xff]
  %v858 = vld [vmem:[%s8 + $0x68] sm:$0xff]
  %v859 = vld [vmem:[%s8 + $0x70] sm:$0xff]
  %v860 = vld [vmem:[%s8 + $0x78] sm:$0xff]
  %v861 = vld [vmem:[%s8 + $0x80] sm:$0xff]
  %v862 = vld [vmem:[%s8 + $0x88] sm:$0xff]
  %v863 = vld [vmem:[%s8 + $0x90] sm:$0xff]
  %v864 = vld [vmem:[%s8 + $0x98] sm:$0xff]
  %v865 = vld [vmem:[%s8 + $0xa0] sm:$0xff]
  %v866 = vld [vmem:[%s8 + $0xa8] sm:$0xff]
  %v867 = vld [vmem:[%s8 + $0xb0] sm:$0xff]
  %v868 = vld [vmem:[%s8 + $0xb8] sm:$0xff]
  %v869 = vld [vmem:[%s8 + $0xc0] sm:$0xff]
  %v870 = vld [vmem:[%s8 + $0xc8] sm:$0xff]
  %v871 = vld [vmem:[%s8 + $0xd0] sm:$0xff]
  %v872 = vld [vmem:[%s8 + $0xd8] sm:$0xff]
  %v873 = vld [vmem:[%s8 + $0xe0] sm:$0xff]
  %v874 = vld [vmem:[%s8 + $0xe8] sm:$0xff]
  %v875 = vld [vmem:[%s8 + $0xf0] sm:$0xff]
  %v876 = vld [vmem:[%s8 + $0xf8] sm:$0xff]
  %v877 = vld [vmem:[%s8 + $0x100] sm:$0xff]
  %v878 = vld [vmem:[%s8 + $0x108] sm:$0xff]
  %v879 = vld [vmem:[%s8 + $0x110] sm:$0xff]
  %v880 = vld [vmem:[%s8 + $0x118] sm:$0xff]
  %v881 = vld [vmem:[%s8 + $0x120] sm:$0xff]
  %v882 = vld [vmem:[%s8 + $0x128] sm:$0xff]
  %v883 = vld [vmem:[%s8 + $0x130] sm:$0xff]
  %v884 = vld [vmem:[%s8 + $0x138] sm:$0xff]
  %v885 = vld [vmem:[%s8 + $0x140] sm:$0xff]
  %v886 = vld [vmem:[%s8 + $0x148] sm:$0xff]
  %v887 = vld [vmem:[%s8 + $0x150] sm:$0xff]
  %v888 = vld [vmem:[%s8 + $0x158] sm:$0xff]
  %v889 = vld [vmem:[%s8 + $0x160] sm:$0xff]
  %v890 = vld [vmem:[%s8 + $0x168] sm:$0xff]
  %v891 = vld [vmem:[%s8 + $0x170] sm:$0xff]
  %v892 = vld [vmem:[%s8 + $0x178] sm:$0xff]
  %v893 = vld [vmem:[%s8 + $0x180] sm:$0xff]
  %v894 = vld [vmem:[%s8 + $0x188] sm:$0xff]
  %v895 = vld [vmem:[%s8 + $0x190] sm:$0xff]
  %v896 = vld [vmem:[%s8 + $0x198] sm:$0xff]
  %v897 = vld [vmem:[%s8 + $0x1a0] sm:$0xff]
  %v898 = vld [vmem:[%s8 + $0x1a8] sm:$0xff]
  %v899 = vld [vmem:[%s8 + $0x1b0] sm:$0xff]
  %v900 = vld [vmem:[%s8 + $0x1b8] sm:$0xff]
  %v901 = vld [vmem:[%s8 + $0x1c0] sm:$0xff]
  %v902 = vld [vmem:[%s8 + $0x1c8] sm:$0xff]
  %v903 = vld [vmem:[%s8 + $0x1d0] sm:$0xff]
  %v904 = vld [vmem:[%s8 + $0x1d8] sm:$0xff]
  %v905 = vld [vmem:[%s8 + $0x1e0] sm:$0xff]
  %v906 = vld [vmem:[%s8 + $0x1e8] sm:$0xff]
  %v907 = vld [vmem:[%s8 + $0x1f0] sm:$0xff]
  %v908 = vld [vmem:[%s8 + $0x1f8] sm:$0xff]
  %v909 = vld [vmem:[%s8 + $0x200] sm:$0xff]
  %v910 = vld [vmem:[%s8 + $0x208] sm:$0xff]
  %v911 = vld [vmem:[%s8 + $0x210] sm:$0xff]
  %v912 = vld [vmem:[%s8 + $0x218] sm:$0xff]
  %v913 = vld [vmem:[%s8 + $0x220] sm:$0xff]
  %v914 = vld [vmem:[%s8 + $0x228] sm:$0xff]
  %v915 = vld [vmem:[%s8 + $0x230] sm:$0xff]
  %v916 = vld [vmem:[%s8 + $0x238] sm:$0xff]
  %v917 = vld [vmem:[%s8 + $0x240] sm:$0xff]
  %v918 = vld [vmem:[%s8 + $0x248] sm:$0xff]
  %v919 = vld [vmem:[%s8 + $0x250] sm:$0xff]
  %v920 = vld [vmem:[%s8 + $0x258] sm:$0xff]
  %v921 = vld [vmem:[%s8 + $0x260] sm:$0xff]
  %v922 = vld [vmem:[%s8 + $0x268] sm:$0xff]
  %v923 = vld [vmem:[%s8 + $0x270] sm:$0xff]
  %v924 = vld [vmem:[%s8 + $0x278] sm:$0xff]
  %v925 = vld [vmem:[%s8 + $0x280] sm:$0xff]
  %v926 = vld [vmem:[%s8 + $0x288] sm:$0xff]
  %v927 = vld [vmem:[%s8 + $0x290] sm:$0xff]
  %v928 = vld [vmem:[%s8 + $0x298] sm:$0xff]
  %v929 = vld [vmem:[%s8 + $0x2a0] sm:$0xff]
  %v930 = vld [vmem:[%s8 + $0x2a8] sm:$0xff]
  %v931 = vld [vmem:[%s8 + $0x2b0] sm:$0xff]
  %v932 = vld [vmem:[%s8 + $0x2b8] sm:$0xff]
  %v933 = vld [vmem:[%s8 + $0x2c0] sm:$0xff]
  %v934 = vld [vmem:[%s8 + $0x2c8] sm:$0xff]
  %v935 = vld [vmem:[%s8 + $0x2d0] sm:$0xff]
  %v936 = vld [vmem:[%s8 + $0x2d8] sm:$0xff]
  %v937 = vld [vmem:[%s8 + $0x2e0] sm:$0xff]
  %v938 = vld [vmem:[%s8 + $0x2e8] sm:$0xff]
  %v939 = vld [vmem:[%s8 + $0x2f0] sm:$0xff]
  %v940 = vld [vmem:[%s8 + $0x2f8] sm:$0xff]
  %v941 = vld [vmem:[%s8 + $0x300] sm:$0xff]
  %v942 = vld [vmem:[%s8 + $0x308] sm:$0xff]
  %v943 = vld [vmem:[%s8 + $0x310] sm:$0xff]
  %v944 = vld [vmem:[%s8 + $0x318] sm:$0xff]
  %v945 = vld [vmem:[%s8 + $0x320] sm:$0xff]
  %v946 = vld [vmem:[%s8 + $0x328] sm:$0xff]
  %v947 = vld [vmem:[%s8 + $0x330] sm:$0xff]
  %v948 = vld [vmem:[%s8 + $0x338] sm:$0xff]
  %v949 = vld [vmem:[%s8 + $0x340] sm:$0xff]
  %v950 = vld [vmem:[%s8 + $0x348] sm:$0xff]
  %v951 = vld [vmem:[%s8 + $0x350] sm:$0xff]
  %v952 = vld [vmem:[%s8 + $0x358] sm:$0xff]
  %v953 = vld [vmem:[%s8 + $0x360] sm:$0xff]
  %v954 = vld [vmem:[%s8 + $0x368] sm:$0xff]
  %v955 = vld [vmem:[%s8 + $0x370] sm:$0xff]
  %v956 = vld [vmem:[%s8 + $0x378] sm:$0xff]
  %v957 = vld [vmem:[%s8 + $0x380] sm:$0xff]
  %v958 = vld [vmem:[%s8 + $0x388] sm:$0xff]
  %v959 = vld [vmem:[%s8 + $0x390] sm:$0xff]
  %v960 = vld [vmem:[%s8 + $0x398] sm:$0xff]
  %v961 = vld [vmem:[%s8 + $0x3a0] sm:$0xff]
  %v962 = vld [vmem:[%s8 + $0x3a8] sm:$0xff]
  %v963 = vld [vmem:[%s8 + $0x3b0] sm:$0xff]
  %v964 = vld [vmem:[%s8 + $0x3b8] sm:$0xff]
  %v965 = vld [vmem:[%s8 + $0x3c0] sm:$0xff]
  %v966 = vld [vmem:[%s8 + $0x3c8] sm:$0xff]
  %v967 = vld [vmem:[%s8 + $0x3d0] sm:$0xff]
  %v968 = vld [vmem:[%s8 + $0x3d8] sm:$0xff]
  %v969 = vld [vmem:[%s8 + $0x3e0] sm:$0xff]
  %v970 = vld [vmem:[%s8 + $0x3e8] sm:$0xff]
  %v971 = vld [vmem:[%s8 + $0x3f0] sm:$0xff]
  %v972 = vld [vmem:[%s8 + $0x3f8] sm:$0xff]
  %v973 = vld [vmem:[%s9] sm:$0x3]
  %v975 = vlaneseq
  %v976 = vshrl.u32 %v975, 7
  %v977 = vsub.s32 0, %v976
  %v978 = vrot.slane %v973, %v977
  %v979 = vlaneseq
  %v980 = vshrl.u32 %v979, 7
  %v981 = vsub.s32 1, %v980
  %v982 = vrot.slane %v973, %v981
  %985 = vmatprep.subr.mxu0 %v876
  %986 = vmatpush1.msra.mxu0 %v875
  %987 = vmatprep.subr.mxu0 %v874
  %988 = vmatpush1.msra.mxu0 %v873
  %989 = vmatprep.subr.mxu0 %v872
  %990 = vmatpush1.msra.mxu0 %v871
  %991 = vmatprep.subr.mxu0 %v870
  %992 = vmatpush1.msra.mxu0 %v869
  %993 = vmatprep.subr.mxu0 %v868
  %994 = vmatpush1.msra.mxu0 %v867
  %995 = vmatprep.subr.mxu0 %v866
  %996 = vmatpush1.msra.mxu0 %v865
  %997 = vmatprep.subr.mxu0 %v864
  %998 = vmatpush1.msra.mxu0 %v863
  %999 = vmatprep.subr.mxu0 %v862
  %1000 = vmatpush1.msra.mxu0 %v861
  %1001 = vmatprep.subr.mxu0 %v860
  %1002 = vmatpush1.msra.mxu0 %v859
  %1003 = vmatprep.subr.mxu0 %v858
  %1004 = vmatpush1.msra.mxu0 %v857
  %1005 = vmatprep.subr.mxu0 %v856
  %1006 = vmatpush1.msra.mxu0 %v855
  %1007 = vmatprep.subr.mxu0 %v854
  %1008 = vmatpush1.msra.mxu0 %v853
  %1009 = vmatprep.subr.mxu0 %v852
  %1010 = vmatpush1.msra.mxu0 %v851
  %1011 = vmatprep.subr.mxu0 %v850
  %1012 = vmatpush1.msra.mxu0 %v849
  %1013 = vmatprep.subr.mxu0 %v848
  %1014 = vmatpush1.msra.mxu0 %v847
  %1015 = vmatprep.subr.mxu0 %v846
  %1016 = vmatpush1.msra.mxu0 %v845
  %1017 = vmatprep.subr.mxu0 %v908
  %1018 = vmatpush2.msra.mxu0 %v907
  %1019 = vmatprep.subr.mxu0 %v906
  %1020 = vmatpush2.msra.mxu0 %v905
  %1021 = vmatprep.subr.mxu0 %v904
  %1022 = vmatpush2.msra.mxu0 %v903
  %1023 = vmatprep.subr.mxu0 %v902
  %1024 = vmatpush2.msra.mxu0 %v901
  %1025 = vmatprep.subr.mxu0 %v900
  %1026 = vmatpush2.msra.mxu0 %v899
  %1027 = vmatprep.subr.mxu0 %v898
  %1028 = vmatpush2.msra.mxu0 %v897
  %1029 = vmatprep.subr.mxu0 %v896
  %1030 = vmatpush2.msra.mxu0 %v895
  %1031 = vmatprep.subr.mxu0 %v894
  %1032 = vmatpush2.msra.mxu0 %v893
  %1033 = vmatprep.subr.mxu0 %v892
  %1034 = vmatpush2.msra.mxu0 %v891
  %1035 = vmatprep.subr.mxu0 %v890
  %1036 = vmatpush2.msra.mxu0 %v889
  %1037 = vmatprep.subr.mxu0 %v888
  %1038 = vmatpush2.msra.mxu0 %v887
  %1039 = vmatprep.subr.mxu0 %v886
  %1040 = vmatpush2.msra.mxu0 %v885
  %1041 = vmatprep.subr.mxu0 %v884
  %1042 = vmatpush2.msra.mxu0 %v883
  %1043 = vmatprep.subr.mxu0 %v882
  %1044 = vmatpush2.msra.mxu0 %v881
  %1045 = vmatprep.subr.mxu0 %v880
  %1046 = vmatpush2.msra.mxu0 %v879
  %1047 = vmatprep.subr.mxu0 %v878
  %1048 = vmatpush2.msra.mxu0 %v877
  %1049 = vmatprep.mubr.f32.mxu0 %v833
  %1050 = vmatmul.mubr.f32.gmra.mxu0 %v839
  %v1051 = vpop.f32.mrf.mxu0
  %v1052 = vadd.f32 %v978, %v1051
  %v1053 = vpop.f32.mrf.mxu0
  %v1054 = vadd.f32 %v982, %v1053
  %1055 = vdwg.mxu0
  %1056 = vmatprep.subr.mxu0 %v940
  %1057 = vmatpush1.msra.mxu0 %v939
  %1058 = vmatprep.subr.mxu0 %v938
  %1059 = vmatpush1.msra.mxu0 %v937
  %1060 = vmatprep.subr.mxu0 %v936
  %1061 = vmatpush1.msra.mxu0 %v935
  %1062 = vmatprep.subr.mxu0 %v934
  %1063 = vmatpush1.msra.mxu0 %v933
  %1064 = vmatprep.subr.mxu0 %v932
  %1065 = vmatpush1.msra.mxu0 %v931
  %1066 = vmatprep.subr.mxu0 %v930
  %1067 = vmatpush1.msra.mxu0 %v929
  %1068 = vmatprep.subr.mxu0 %v928
  %1069 = vmatpush1.msra.mxu0 %v927
  %1070 = vmatprep.subr.mxu0 %v926
  %1071 = vmatpush1.msra.mxu0 %v925
  %1072 = vmatprep.subr.mxu0 %v924
  %1073 = vmatpush1.msra.mxu0 %v923
  %1074 = vmatprep.subr.mxu0 %v922
  %1075 = vmatpush1.msra.mxu0 %v921
  %1076 = vmatprep.subr.mxu0 %v920
  %1077 = vmatpush1.msra.mxu0 %v919
  %1078 = vmatprep.subr.mxu0 %v918
  %1079 = vmatpush1.msra.mxu0 %v917
  %1080 = vmatprep.subr.mxu0 %v916
  %1081 = vmatpush1.msra.mxu0 %v915
  %1082 = vmatprep.subr.mxu0 %v914
  %1083 = vmatpush1.msra.mxu0 %v913
  %1084 = vmatprep.subr.mxu0 %v912
  %1085 = vmatpush1.msra.mxu0 %v911
  %1086 = vmatprep.subr.mxu0 %v910
  %1087 = vmatpush1.msra.mxu0 %v909
  %1088 = vmatprep.subr.mxu0 %v972
  %1089 = vmatpush2.msra.mxu0 %v971
  %1090 = vmatprep.subr.mxu0 %v970
  %1091 = vmatpush2.msra.mxu0 %v969
  %1092 = vmatprep.subr.mxu0 %v968
  %1093 = vmatpush2.msra.mxu0 %v967
  %1094 = vmatprep.subr.mxu0 %v966
  %1095 = vmatpush2.msra.mxu0 %v965
  %1096 = vmatprep.subr.mxu0 %v964
  %1097 = vmatpush2.msra.mxu0 %v963
  %1098 = vmatprep.subr.mxu0 %v962
  %1099 = vmatpush2.msra.mxu0 %v961
  %1100 = vmatprep.subr.mxu0 %v960
  %1101 = vmatpush2.msra.mxu0 %v959
  %1102 = vmatprep.subr.mxu0 %v958
  %1103 = vmatpush2.msra.mxu0 %v957
  %1104 = vmatprep.subr.mxu0 %v956
  %1105 = vmatpush2.msra.mxu0 %v955
  %1106 = vmatprep.subr.mxu0 %v954
  %1107 = vmatpush2.msra.mxu0 %v953
  %1108 = vmatprep.subr.mxu0 %v952
  %1109 = vmatpush2.msra.mxu0 %v951
  %1110 = vmatprep.subr.mxu0 %v950
  %1111 = vmatpush2.msra.mxu0 %v949
  %1112 = vmatprep.subr.mxu0 %v948
  %1113 = vmatpush2.msra.mxu0 %v947
  %1114 = vmatprep.subr.mxu0 %v946
  %1115 = vmatpush2.msra.mxu0 %v945
  %1116 = vmatprep.subr.mxu0 %v944
  %1117 = vmatpush2.msra.mxu0 %v943
  %1118 = vmatprep.subr.mxu0 %v942
  %1119 = vmatpush2.msra.mxu0 %v941
  %1120 = vmatprep.mubr.f32.mxu0 %v844
  %1121 = vmatmul.mubr.f32.gmra.mxu0 %v834
  %v1122 = vpop.f32.mrf.mxu0
  %v1123 = vadd.f32 %v1052, %v1122
  %v1124 = vpop.f32.mrf.mxu0
  %v1125 = vadd.f32 %v1054, %v1124
  %1126 = vdwg.mxu0
  %v1127 = vtanh.pop %v1123
  %v1128 = vtanh.pop %v1125
  %1129 = vst [vmem:[%s10] sm:$0xff] %v1127
  %1130 = vst.msk [vmem:[%s10 + $0x8] sm:$0xff] %vm271, %v1128
  // Predicated region
  $region42: #{generator_forward.1} parent=0 // pred_check
    _
  $region43: #{generator_forward.1} parent=0 // pred_check_branch
    %1132 = sbr.rel (0) target = $region45
  $region44: #{generator_forward.1} parent=0 // pred_region
    _
  $region45: #{generator_forward.1} parent=0 // pred_fallthru
    _
  // Predicated region
  $region46: #{generator_forward.1} parent=0 // pred_check
    _
  $region47: #{generator_forward.1} parent=0 // pred_check_branch
    %1134 = sbr.rel (0) target = $region49
  $region48: #{generator_forward.1} parent=0 // pred_region
    _
  $region49: #{generator_forward.1} parent=0 // pred_fallthru
    _

</llo_original>
